<compile_context>
chip_gen: v7x
topology: tpu7x:2x2x1
jax: 0.10.0
libtpu: 0.0.40
codegen_flags: <defaults>
</compile_context>

<pallas_src>
import functools

import jax
import jax.numpy as jnp
from jax.experimental import pallas as pl
from jax.experimental.pallas import tpu as pltpu


# ---------------------------------------------------------------------------
# Fused Pallas kernel: all residual blocks + skip accumulation + post head
# ---------------------------------------------------------------------------
def _wavenet_fused_kernel(x_ref, wg_ref, wos_ref, bos_ref,
                          wa_ref, ba_ref, wb_ref, bb_ref,
                          out_ref, *, dilations, remain):
    """One batch element.

    x_ref   : (1, C, T)        f32 embedded input
    wg_ref  : (L, 2C, 2C)      bf16  [[w10, w11], [w20, w21]] per block
    wos_ref : (L, 2C, C)       bf16  [wo ; ws] per block
    bos_ref : (L, 2C, 1)       f32   [bo ; bs] per block
    wa/ba   : (C, C) bf16, (C, 1) f32   post 1x1 conv #1
    wb/bb   : (classes, C) bf16, (classes, 1) f32   post 1x1 conv #2
    out_ref : (1, classes, remain) f32 logits
    """
    C = wa_ref.shape[0]
    h = x_ref[0]                                    # (C, T) f32 residual stream
    skip = jnp.zeros((C, remain), jnp.float32)      # skip accumulator (in VMEM)

    for i, d in enumerate(dilations):               # static unroll (6 blocks)
        t_out = h.shape[-1] - d
        x_r = h[:, d:]                              # f32, residual shortcut
        hb = h.astype(jnp.bfloat16)                 # bf16 operands for the MXU
        x_cat = jnp.concatenate([hb[:, :t_out], hb[:, d:]], axis=0)  # (2C,t_out)

        # Both gate branches in one MXU push: [h ; h1] = Wg @ [x_l ; x_r]
        gate = jnp.dot(wg_ref[i], x_cat,
                       preferred_element_type=jnp.float32)           # (2C,t_out)
        w = jnp.tanh(gate[:C]) * jax.nn.sigmoid(gate[C:])             # (C, t_out)

        # 1x1 output conv and skip conv in one MXU push: [o ; s] = Wos @ w
        os = jnp.dot(wos_ref[i], w.astype(jnp.bfloat16),
                     preferred_element_type=jnp.float32) + bos_ref[i]  # (2C,t_out)
        h = os[:C] + x_r                            # residual output (f32)
        skip = skip + os[C:, t_out - remain:]       # s[:, -remain:] accumulated

    # Post head: ReLU -> 1x1 conv -> ReLU -> 1x1 conv, fused in the same kernel
    a = jnp.maximum(skip, 0.0)
    hp = jnp.dot(wa_ref[...], a.astype(jnp.bfloat16),
                 preferred_element_type=jnp.float32) + ba_ref[...]
    hp = jnp.maximum(hp, 0.0)
    out_ref[0] = (jnp.dot(wb_ref[...], hp.astype(jnp.bfloat16),
                          preferred_element_type=jnp.float32) + bb_ref[...])


# ---------------------------------------------------------------------------
# Wrapper (weight packing + pallas_call plumbing)
# ---------------------------------------------------------------------------
def wavenet_forward(x_idx, params, dilations):
    """x_idx: (B, T) int32 class indices.  Returns (B, classes, remain) logits."""
    receive_field = 1 + sum(dilations)
    B, T = x_idx.shape
    remain = T - receive_field + 1

    # Embedding gather + NCW transpose: plain JAX glue (dynamic gather has no
    # clean small-scale Pallas equivalent).
    h = jnp.transpose(params["emb"][x_idx], (0, 2, 1)).astype(jnp.float32)
    C = h.shape[1]
    L = len(dilations)

    # Trace-time packing of per-block weights into the stacked forms.
    wg_l, wos_l, bos_l = [], [], []
    for (w10, w11, w20, w21, wo, bo, ws, bs) in params["blocks"]:
        wg_l.append(jnp.block([[w10, w11], [w20, w21]]))    # (2C, 2C)
        wos_l.append(jnp.concatenate([wo, ws], axis=0))     # (2C, C)
        bos_l.append(jnp.concatenate([bo, bs], axis=0))     # (2C, 1)
    wg = jnp.stack(wg_l).astype(jnp.bfloat16)               # (L, 2C, 2C)
    wos = jnp.stack(wos_l).astype(jnp.bfloat16)             # (L, 2C, C)
    bos = jnp.stack(bos_l)                                  # (L, 2C, 1) f32

    wa, ba, wb, bb = params["post"]
    wa = wa.astype(jnp.bfloat16)
    wb = wb.astype(jnp.bfloat16)
    classes = wb.shape[0]

    kernel = functools.partial(_wavenet_fused_kernel,
                               dilations=tuple(dilations), remain=remain)
    full2 = lambda b: (0, 0)
    full3 = lambda b: (0, 0, 0)
    per_b = lambda b: (b, 0, 0)

    return pl.pallas_call(
        kernel,
        out_shape=jax.ShapeDtypeStruct((B, classes, remain), jnp.float32),
        grid=(B,),
        in_specs=[
            pl.BlockSpec((1, C, T), per_b),              # activations, per batch
            pl.BlockSpec((L, 2 * C, 2 * C), full3),      # gate weights (resident)
            pl.BlockSpec((L, 2 * C, C), full3),          # out/skip weights
            pl.BlockSpec((L, 2 * C, 1), full3),          # out/skip biases
            pl.BlockSpec((C, C), full2),                 # post conv #1 weight
            pl.BlockSpec((C, 1), full2),                 # post conv #1 bias
            pl.BlockSpec((classes, C), full2),           # post conv #2 weight
            pl.BlockSpec((classes, 1), full2),           # post conv #2 bias
        ],
        out_specs=pl.BlockSpec((1, classes, remain), per_b),
        compiler_params=pltpu.CompilerParams(
            dimension_semantics=("parallel",)),          # v7x: batch across TCs
    )(h, wg, wos, bos, wa, ba, wb, bb)


# ---------------------------------------------------------------------------
# Deterministic parameter init (mirrors the PyTorch module's shapes)
# ---------------------------------------------------------------------------
def init_params(key, classes, res_chan, dilations):
    K = 2
    n_keys = 1 + len(dilations) * 8 + 4
    keys = iter(jax.random.split(key, n_keys))

    def kaiming(k, shape, gain):
        fan_in = shape[1] * (shape[2] if len(shape) == 3 else 1)
        std = gain / jnp.sqrt(jnp.asarray(fan_in, jnp.float32))
        return jax.random.normal(k, shape, jnp.float32) * std

    params = {"emb": jax.random.normal(next(keys), (classes, res_chan),
                                       jnp.float32)}
    blocks = []
    for _ in dilations:
        w1 = kaiming(next(keys), (res_chan, res_chan, K), gain=5.0 / 3.0)  # tanh
        w2 = kaiming(next(keys), (res_chan, res_chan, K), gain=1.0)        # linear
        wo = kaiming(next(keys), (res_chan, res_chan, 1), gain=1.0)[:, :, 0]
        bo = jax.random.uniform(next(keys), (res_chan, 1), jnp.float32,
                                -0.1, 0.1)
        ws = kaiming(next(keys), (res_chan, res_chan, 1), gain=1.0)[:, :, 0]
        bs = jax.random.uniform(next(keys), (res_chan, 1), jnp.float32,
                                -0.1, 0.1)
        _ = next(keys), next(keys)  # keep key budget aligned
        blocks.append((w1[:, :, 0], w1[:, :, 1], w2[:, :, 0], w2[:, :, 1],
                       wo, bo, ws, bs))
    params["blocks"] = blocks

    wa = kaiming(next(keys), (res_chan, res_chan, 1), gain=1.0)[:, :, 0]
    ba = jax.random.uniform(next(keys), (res_chan, 1), jnp.float32, -0.1, 0.1)
    wb = kaiming(next(keys), (classes, res_chan, 1), gain=1.0)[:, :, 0]
    bb = jax.random.uniform(next(keys), (classes, 1), jnp.float32, -0.1, 0.1)
    params["post"] = (wa, ba, wb, bb)
    return params


# ---------------------------------------------------------------------------
# Pure-JAX reference (same math, same bf16-operand / f32-accum matmul policy)
# ---------------------------------------------------------------------------
def reference_forward(x_idx, params, dilations):
    receive_field = 1 + sum(dilations)
    B, T = x_idx.shape
    remain = T - receive_field + 1
    h = jnp.transpose(params["emb"][x_idx], (0, 2, 1)).astype(jnp.float32)

    def mm(w, x):  # bf16 operands, f32 accumulation (matches kernel policy)
        return jnp.einsum("oc,bct->bot", w.astype(jnp.bfloat16),
                          x.astype(jnp.bfloat16),
                          preferred_element_type=jnp.float32)

    output = 0.0
    for (w10, w11, w20, w21, wo, bo, ws, bs), d in zip(params["blocks"],
                                                       dilations):
        t_out = h.shape[-1] - d
        x_l, x_r = h[:, :, :t_out], h[:, :, d:]
        a = mm(w10, x_l) + mm(w11, x_r)
        b = mm(w20, x_l) + mm(w21, x_r)
        w = jnp.tanh(a) * jax.nn.sigmoid(b)
        o = mm(wo, w) + bo[None] + x_r
        s = mm(ws, w) + bs[None]
        output = output + s[:, :, -remain:]
        h = o
    wa, ba, wb, bb = params["post"]
    x = jnp.maximum(output, 0.0)
    x = jnp.maximum(mm(wa, x) + ba[None], 0.0)
    return mm(wb, x) + bb[None]


# ---------------------------------------------------------------------------
if __name__ == "__main__":
    classes, res_chan, stacks, layers = 16, 32, 2, 3
    dilations = [2 ** l for l in range(layers)] * stacks   # [1,2,4,1,2,4]
    B, T = 2, 32                                            # remain = 18

    key = jax.random.PRNGKey(0)
    pkey, xkey = jax.random.split(key)
    params = init_params(pkey, classes, res_chan, dilations)
    x_idx = jax.random.randint(xkey, (B, T), 0, classes, dtype=jnp.int32)

    fwd = jax.jit(lambda xi: wavenet_forward(xi, params, dilations))
    logits = jax.block_until_ready(fwd(x_idx))

    ref = reference_forward(x_idx, params, dilations)
    assert logits.shape == (B, classes, T - (1 + sum(dilations)) + 1)
    assert jnp.allclose(logits, ref, atol=1e-2, rtol=1e-2), \
        float(jnp.max(jnp.abs(logits - ref)))

    print("KERNEL_OK")
</pallas_src>

<mosaic_0001>
module attributes {stable_mosaic.version = 11 : i64} {
  func.func @_wavenet_fused_kernel(%arg0: i32, %arg1: memref<1x32x32xf32, #tpu.memory_space<vmem>>, %arg2: memref<6x64x64xbf16, #tpu.memory_space<vmem>>, %arg3: memref<6x64x32xbf16, #tpu.memory_space<vmem>>, %arg4: memref<6x64x1xf32, #tpu.memory_space<vmem>>, %arg5: memref<32x32xbf16, #tpu.memory_space<vmem>>, %arg6: memref<32x1xf32, #tpu.memory_space<vmem>>, %arg7: memref<16x32xbf16, #tpu.memory_space<vmem>>, %arg8: memref<16x1xf32, #tpu.memory_space<vmem>>, %arg9: memref<1x16x18xf32, #tpu.memory_space<vmem>>) attributes {dimension_semantics = [#tpu.dimension_semantics<parallel>], iteration_bounds = array<i64: 2>, scalar_prefetch = 0 : i64, scratch_operands = 0 : i64, tpu.core_type = #tpu.core_type<tc>, window_params = [{transform_indices = @transform_0, window_bounds = array<i64: 1, 32, 32>}, {pipeline_mode = #tpu.pipeline_mode<synchronous>, transform_indices = @transform_1, window_bounds = array<i64: 6, 64, 64>}, {pipeline_mode = #tpu.pipeline_mode<synchronous>, transform_indices = @transform_2, window_bounds = array<i64: 6, 64, 32>}, {pipeline_mode = #tpu.pipeline_mode<synchronous>, transform_indices = @transform_3, window_bounds = array<i64: 6, 64, 1>}, {pipeline_mode = #tpu.pipeline_mode<synchronous>, transform_indices = @transform_4, window_bounds = array<i64: 32, 32>}, {pipeline_mode = #tpu.pipeline_mode<synchronous>, transform_indices = @transform_5, window_bounds = array<i64: 32, 1>}, {pipeline_mode = #tpu.pipeline_mode<synchronous>, transform_indices = @transform_6, window_bounds = array<i64: 16, 32>}, {pipeline_mode = #tpu.pipeline_mode<synchronous>, transform_indices = @transform_7, window_bounds = array<i64: 16, 1>}, {transform_indices = @transform_8, window_bounds = array<i64: 1, 16, 18>}]} {
    %c0 = arith.constant 0 : index
    %c0_0 = arith.constant 0 : index
    %c0_1 = arith.constant 0 : index
    %0 = vector.load %arg1[%c0, %c0_0, %c0_1] : memref<1x32x32xf32, #tpu.memory_space<vmem>>, vector<1x32x32xf32>
    %1 = vector.shape_cast %0 : vector<1x32x32xf32> to vector<32x32xf32>
    %cst = arith.constant 0.000000e+00 : f32
    %2 = vector.broadcast %cst : f32 to vector<32x18xf32>
    %3 = vector.extract_strided_slice %1 {offsets = [0, 1], sizes = [32, 31], strides = [1, 1]} : vector<32x32xf32> to vector<32x31xf32>
    %4 = arith.truncf %1 : vector<32x32xf32> to vector<32x32xbf16>
    %5 = vector.extract_strided_slice %4 {offsets = [0, 0], sizes = [32, 31], strides = [1, 1]} : vector<32x32xbf16> to vector<32x31xbf16>
    %6 = vector.extract_strided_slice %4 {offsets = [0, 1], sizes = [32, 31], strides = [1, 1]} : vector<32x32xbf16> to vector<32x31xbf16>
    %7 = tpu.concatenate %5, %6 in 0 : vector<32x31xbf16>, vector<32x31xbf16> -> vector<64x31xbf16>
    %c0_2 = arith.constant 0 : index
    %c0_3 = arith.constant 0 : index
    %c0_4 = arith.constant 0 : index
    %8 = vector.load %arg2[%c0_2, %c0_3, %c0_4] : memref<6x64x64xbf16, #tpu.memory_space<vmem>>, vector<1x64x64xbf16>
    %9 = vector.shape_cast %8 : vector<1x64x64xbf16> to vector<64x64xbf16>
    %cst_5 = arith.constant dense<0.000000e+00> : vector<64x31xf32>
    %10 = tpu.matmul %9, %7, %cst_5 {dimension_numbers = #tpu.dot_dimension_numbers<[1], [0], [0], [1], [0, 0, 1, 1], [], []>} : vector<64x64xbf16>, vector<64x31xbf16>, vector<64x31xf32> -> vector<64x31xf32>
    %11 = vector.extract_strided_slice %10 {offsets = [0, 0], sizes = [32, 31], strides = [1, 1]} : vector<64x31xf32> to vector<32x31xf32>
    %12 = math.tanh %11 : vector<32x31xf32>
    %13 = vector.extract_strided_slice %10 {offsets = [32, 0], sizes = [32, 31], strides = [1, 1]} : vector<64x31xf32> to vector<32x31xf32>
    %14 = arith.negf %13 : vector<32x31xf32>
    %15 = math.exp %14 : vector<32x31xf32>
    %cst_6 = arith.constant 1.000000e+00 : f32
    %16 = vector.broadcast %cst_6 : f32 to vector<32x31xf32>
    %17 = arith.addf %16, %15 : vector<32x31xf32>
    %18 = arith.divf %16, %17 : vector<32x31xf32>
    %19 = arith.mulf %12, %18 : vector<32x31xf32>
    %c0_7 = arith.constant 0 : index
    %c0_8 = arith.constant 0 : index
    %c0_9 = arith.constant 0 : index
    %20 = vector.load %arg3[%c0_7, %c0_8, %c0_9] : memref<6x64x32xbf16, #tpu.memory_space<vmem>>, vector<1x64x32xbf16>
    %21 = vector.shape_cast %20 : vector<1x64x32xbf16> to vector<64x32xbf16>
    %22 = arith.truncf %19 : vector<32x31xf32> to vector<32x31xbf16>
    %cst_10 = arith.constant dense<0.000000e+00> : vector<64x31xf32>
    %23 = tpu.matmul %21, %22, %cst_10 {dimension_numbers = #tpu.dot_dimension_numbers<[1], [0], [0], [1], [0, 0, 1, 1], [], []>} : vector<64x32xbf16>, vector<32x31xbf16>, vector<64x31xf32> -> vector<64x31xf32>
    %c0_11 = arith.constant 0 : index
    %c0_12 = arith.constant 0 : index
    %c0_13 = arith.constant 0 : index
    %24 = vector.load %arg4[%c0_11, %c0_12, %c0_13] : memref<6x64x1xf32, #tpu.memory_space<vmem>>, vector<1x64x1xf32>
    %25 = vector.shape_cast %24 : vector<1x64x1xf32> to vector<64x1xf32>
    %26 = vector.broadcast %25 : vector<64x1xf32> to vector<64x31xf32>
    %27 = arith.addf %23, %26 : vector<64x31xf32>
    %28 = vector.extract_strided_slice %27 {offsets = [0, 0], sizes = [32, 31], strides = [1, 1]} : vector<64x31xf32> to vector<32x31xf32>
    %29 = arith.addf %28, %3 : vector<32x31xf32>
    %30 = vector.extract_strided_slice %27 {offsets = [32, 13], sizes = [32, 18], strides = [1, 1]} : vector<64x31xf32> to vector<32x18xf32>
    %31 = arith.addf %2, %30 : vector<32x18xf32>
    %32 = vector.extract_strided_slice %29 {offsets = [0, 2], sizes = [32, 29], strides = [1, 1]} : vector<32x31xf32> to vector<32x29xf32>
    %33 = arith.truncf %29 : vector<32x31xf32> to vector<32x31xbf16>
    %34 = vector.extract_strided_slice %33 {offsets = [0, 0], sizes = [32, 29], strides = [1, 1]} : vector<32x31xbf16> to vector<32x29xbf16>
    %35 = vector.extract_strided_slice %33 {offsets = [0, 2], sizes = [32, 29], strides = [1, 1]} : vector<32x31xbf16> to vector<32x29xbf16>
    %36 = tpu.concatenate %34, %35 in 0 : vector<32x29xbf16>, vector<32x29xbf16> -> vector<64x29xbf16>
    %c1 = arith.constant 1 : index
    %c0_14 = arith.constant 0 : index
    %c0_15 = arith.constant 0 : index
    %37 = vector.load %arg2[%c1, %c0_14, %c0_15] : memref<6x64x64xbf16, #tpu.memory_space<vmem>>, vector<1x64x64xbf16>
    %38 = vector.shape_cast %37 : vector<1x64x64xbf16> to vector<64x64xbf16>
    %cst_16 = arith.constant dense<0.000000e+00> : vector<64x29xf32>
    %39 = tpu.matmul %38, %36, %cst_16 {dimension_numbers = #tpu.dot_dimension_numbers<[1], [0], [0], [1], [0, 0, 1, 1], [], []>} : vector<64x64xbf16>, vector<64x29xbf16>, vector<64x29xf32> -> vector<64x29xf32>
    %40 = vector.extract_strided_slice %39 {offsets = [0, 0], sizes = [32, 29], strides = [1, 1]} : vector<64x29xf32> to vector<32x29xf32>
    %41 = math.tanh %40 : vector<32x29xf32>
    %42 = vector.extract_strided_slice %39 {offsets = [32, 0], sizes = [32, 29], strides = [1, 1]} : vector<64x29xf32> to vector<32x29xf32>
    %43 = arith.negf %42 : vector<32x29xf32>
    %44 = math.exp %43 : vector<32x29xf32>
    %cst_17 = arith.constant 1.000000e+00 : f32
    %45 = vector.broadcast %cst_17 : f32 to vector<32x29xf32>
    %46 = arith.addf %45, %44 : vector<32x29xf32>
    %47 = arith.divf %45, %46 : vector<32x29xf32>
    %48 = arith.mulf %41, %47 : vector<32x29xf32>
    %c1_18 = arith.constant 1 : index
    %c0_19 = arith.constant 0 : index
    %c0_20 = arith.constant 0 : index
    %49 = vector.load %arg3[%c1_18, %c0_19, %c0_20] : memref<6x64x32xbf16, #tpu.memory_space<vmem>>, vector<1x64x32xbf16>
    %50 = vector.shape_cast %49 : vector<1x64x32xbf16> to vector<64x32xbf16>
    %51 = arith.truncf %48 : vector<32x29xf32> to vector<32x29xbf16>
    %cst_21 = arith.constant dense<0.000000e+00> : vector<64x29xf32>
    %52 = tpu.matmul %50, %51, %cst_21 {dimension_numbers = #tpu.dot_dimension_numbers<[1], [0], [0], [1], [0, 0, 1, 1], [], []>} : vector<64x32xbf16>, vector<32x29xbf16>, vector<64x29xf32> -> vector<64x29xf32>
    %c1_22 = arith.constant 1 : index
    %c0_23 = arith.constant 0 : index
    %c0_24 = arith.constant 0 : index
    %53 = vector.load %arg4[%c1_22, %c0_23, %c0_24] : memref<6x64x1xf32, #tpu.memory_space<vmem>>, vector<1x64x1xf32>
    %54 = vector.shape_cast %53 : vector<1x64x1xf32> to vector<64x1xf32>
    %55 = vector.broadcast %54 : vector<64x1xf32> to vector<64x29xf32>
    %56 = arith.addf %52, %55 : vector<64x29xf32>
    %57 = vector.extract_strided_slice %56 {offsets = [0, 0], sizes = [32, 29], strides = [1, 1]} : vector<64x29xf32> to vector<32x29xf32>
    %58 = arith.addf %57, %32 : vector<32x29xf32>
    %59 = vector.extract_strided_slice %56 {offsets = [32, 11], sizes = [32, 18], strides = [1, 1]} : vector<64x29xf32> to vector<32x18xf32>
    %60 = arith.addf %31, %59 : vector<32x18xf32>
    %61 = vector.extract_strided_slice %58 {offsets = [0, 4], sizes = [32, 25], strides = [1, 1]} : vector<32x29xf32> to vector<32x25xf32>
    %62 = arith.truncf %58 : vector<32x29xf32> to vector<32x29xbf16>
    %63 = vector.extract_strided_slice %62 {offsets = [0, 0], sizes = [32, 25], strides = [1, 1]} : vector<32x29xbf16> to vector<32x25xbf16>
    %64 = vector.extract_strided_slice %62 {offsets = [0, 4], sizes = [32, 25], strides = [1, 1]} : vector<32x29xbf16> to vector<32x25xbf16>
    %65 = tpu.concatenate %63, %64 in 0 : vector<32x25xbf16>, vector<32x25xbf16> -> vector<64x25xbf16>
    %c2 = arith.constant 2 : index
    %c0_25 = arith.constant 0 : index
    %c0_26 = arith.constant 0 : index
    %66 = vector.load %arg2[%c2, %c0_25, %c0_26] : memref<6x64x64xbf16, #tpu.memory_space<vmem>>, vector<1x64x64xbf16>
    %67 = vector.shape_cast %66 : vector<1x64x64xbf16> to vector<64x64xbf16>
    %cst_27 = arith.constant dense<0.000000e+00> : vector<64x25xf32>
    %68 = tpu.matmul %67, %65, %cst_27 {dimension_numbers = #tpu.dot_dimension_numbers<[1], [0], [0], [1], [0, 0, 1, 1], [], []>} : vector<64x64xbf16>, vector<64x25xbf16>, vector<64x25xf32> -> vector<64x25xf32>
    %69 = vector.extract_strided_slice %68 {offsets = [0, 0], sizes = [32, 25], strides = [1, 1]} : vector<64x25xf32> to vector<32x25xf32>
    %70 = math.tanh %69 : vector<32x25xf32>
    %71 = vector.extract_strided_slice %68 {offsets = [32, 0], sizes = [32, 25], strides = [1, 1]} : vector<64x25xf32> to vector<32x25xf32>
    %72 = arith.negf %71 : vector<32x25xf32>
    %73 = math.exp %72 : vector<32x25xf32>
    %cst_28 = arith.constant 1.000000e+00 : f32
    %74 = vector.broadcast %cst_28 : f32 to vector<32x25xf32>
    %75 = arith.addf %74, %73 : vector<32x25xf32>
    %76 = arith.divf %74, %75 : vector<32x25xf32>
    %77 = arith.mulf %70, %76 : vector<32x25xf32>
    %c2_29 = arith.constant 2 : index
    %c0_30 = arith.constant 0 : index
    %c0_31 = arith.constant 0 : index
    %78 = vector.load %arg3[%c2_29, %c0_30, %c0_31] : memref<6x64x32xbf16, #tpu.memory_space<vmem>>, vector<1x64x32xbf16>
    %79 = vector.shape_cast %78 : vector<1x64x32xbf16> to vector<64x32xbf16>
    %80 = arith.truncf %77 : vector<32x25xf32> to vector<32x25xbf16>
    %cst_32 = arith.constant dense<0.000000e+00> : vector<64x25xf32>
    %81 = tpu.matmul %79, %80, %cst_32 {dimension_numbers = #tpu.dot_dimension_numbers<[1], [0], [0], [1], [0, 0, 1, 1], [], []>} : vector<64x32xbf16>, vector<32x25xbf16>, vector<64x25xf32> -> vector<64x25xf32>
    %c2_33 = arith.constant 2 : index
    %c0_34 = arith.constant 0 : index
    %c0_35 = arith.constant 0 : index
    %82 = vector.load %arg4[%c2_33, %c0_34, %c0_35] : memref<6x64x1xf32, #tpu.memory_space<vmem>>, vector<1x64x1xf32>
    %83 = vector.shape_cast %82 : vector<1x64x1xf32> to vector<64x1xf32>
    %84 = vector.broadcast %83 : vector<64x1xf32> to vector<64x25xf32>
    %85 = arith.addf %81, %84 : vector<64x25xf32>
    %86 = vector.extract_strided_slice %85 {offsets = [0, 0], sizes = [32, 25], strides = [1, 1]} : vector<64x25xf32> to vector<32x25xf32>
    %87 = arith.addf %86, %61 : vector<32x25xf32>
    %88 = vector.extract_strided_slice %85 {offsets = [32, 7], sizes = [32, 18], strides = [1, 1]} : vector<64x25xf32> to vector<32x18xf32>
    %89 = arith.addf %60, %88 : vector<32x18xf32>
    %90 = vector.extract_strided_slice %87 {offsets = [0, 1], sizes = [32, 24], strides = [1, 1]} : vector<32x25xf32> to vector<32x24xf32>
    %91 = arith.truncf %87 : vector<32x25xf32> to vector<32x25xbf16>
    %92 = vector.extract_strided_slice %91 {offsets = [0, 0], sizes = [32, 24], strides = [1, 1]} : vector<32x25xbf16> to vector<32x24xbf16>
    %93 = vector.extract_strided_slice %91 {offsets = [0, 1], sizes = [32, 24], strides = [1, 1]} : vector<32x25xbf16> to vector<32x24xbf16>
    %94 = tpu.concatenate %92, %93 in 0 : vector<32x24xbf16>, vector<32x24xbf16> -> vector<64x24xbf16>
    %c3 = arith.constant 3 : index
    %c0_36 = arith.constant 0 : index
    %c0_37 = arith.constant 0 : index
    %95 = vector.load %arg2[%c3, %c0_36, %c0_37] : memref<6x64x64xbf16, #tpu.memory_space<vmem>>, vector<1x64x64xbf16>
    %96 = vector.shape_cast %95 : vector<1x64x64xbf16> to vector<64x64xbf16>
    %cst_38 = arith.constant dense<0.000000e+00> : vector<64x24xf32>
    %97 = tpu.matmul %96, %94, %cst_38 {dimension_numbers = #tpu.dot_dimension_numbers<[1], [0], [0], [1], [0, 0, 1, 1], [], []>} : vector<64x64xbf16>, vector<64x24xbf16>, vector<64x24xf32> -> vector<64x24xf32>
    %98 = vector.extract_strided_slice %97 {offsets = [0, 0], sizes = [32, 24], strides = [1, 1]} : vector<64x24xf32> to vector<32x24xf32>
    %99 = math.tanh %98 : vector<32x24xf32>
    %100 = vector.extract_strided_slice %97 {offsets = [32, 0], sizes = [32, 24], strides = [1, 1]} : vector<64x24xf32> to vector<32x24xf32>
    %101 = arith.negf %100 : vector<32x24xf32>
    %102 = math.exp %101 : vector<32x24xf32>
    %cst_39 = arith.constant 1.000000e+00 : f32
    %103 = vector.broadcast %cst_39 : f32 to vector<32x24xf32>
    %104 = arith.addf %103, %102 : vector<32x24xf32>
    %105 = arith.divf %103, %104 : vector<32x24xf32>
    %106 = arith.mulf %99, %105 : vector<32x24xf32>
    %c3_40 = arith.constant 3 : index
    %c0_41 = arith.constant 0 : index
    %c0_42 = arith.constant 0 : index
    %107 = vector.load %arg3[%c3_40, %c0_41, %c0_42] : memref<6x64x32xbf16, #tpu.memory_space<vmem>>, vector<1x64x32xbf16>
    %108 = vector.shape_cast %107 : vector<1x64x32xbf16> to vector<64x32xbf16>
    %109 = arith.truncf %106 : vector<32x24xf32> to vector<32x24xbf16>
    %cst_43 = arith.constant dense<0.000000e+00> : vector<64x24xf32>
    %110 = tpu.matmul %108, %109, %cst_43 {dimension_numbers = #tpu.dot_dimension_numbers<[1], [0], [0], [1], [0, 0, 1, 1], [], []>} : vector<64x32xbf16>, vector<32x24xbf16>, vector<64x24xf32> -> vector<64x24xf32>
    %c3_44 = arith.constant 3 : index
    %c0_45 = arith.constant 0 : index
    %c0_46 = arith.constant 0 : index
    %111 = vector.load %arg4[%c3_44, %c0_45, %c0_46] : memref<6x64x1xf32, #tpu.memory_space<vmem>>, vector<1x64x1xf32>
    %112 = vector.shape_cast %111 : vector<1x64x1xf32> to vector<64x1xf32>
    %113 = vector.broadcast %112 : vector<64x1xf32> to vector<64x24xf32>
    %114 = arith.addf %110, %113 : vector<64x24xf32>
    %115 = vector.extract_strided_slice %114 {offsets = [0, 0], sizes = [32, 24], strides = [1, 1]} : vector<64x24xf32> to vector<32x24xf32>
    %116 = arith.addf %115, %90 : vector<32x24xf32>
    %117 = vector.extract_strided_slice %114 {offsets = [32, 6], sizes = [32, 18], strides = [1, 1]} : vector<64x24xf32> to vector<32x18xf32>
    %118 = arith.addf %89, %117 : vector<32x18xf32>
    %119 = vector.extract_strided_slice %116 {offsets = [0, 2], sizes = [32, 22], strides = [1, 1]} : vector<32x24xf32> to vector<32x22xf32>
    %120 = arith.truncf %116 : vector<32x24xf32> to vector<32x24xbf16>
    %121 = vector.extract_strided_slice %120 {offsets = [0, 0], sizes = [32, 22], strides = [1, 1]} : vector<32x24xbf16> to vector<32x22xbf16>
    %122 = vector.extract_strided_slice %120 {offsets = [0, 2], sizes = [32, 22], strides = [1, 1]} : vector<32x24xbf16> to vector<32x22xbf16>
    %123 = tpu.concatenate %121, %122 in 0 : vector<32x22xbf16>, vector<32x22xbf16> -> vector<64x22xbf16>
    %c4 = arith.constant 4 : index
    %c0_47 = arith.constant 0 : index
    %c0_48 = arith.constant 0 : index
    %124 = vector.load %arg2[%c4, %c0_47, %c0_48] : memref<6x64x64xbf16, #tpu.memory_space<vmem>>, vector<1x64x64xbf16>
    %125 = vector.shape_cast %124 : vector<1x64x64xbf16> to vector<64x64xbf16>
    %cst_49 = arith.constant dense<0.000000e+00> : vector<64x22xf32>
    %126 = tpu.matmul %125, %123, %cst_49 {dimension_numbers = #tpu.dot_dimension_numbers<[1], [0], [0], [1], [0, 0, 1, 1], [], []>} : vector<64x64xbf16>, vector<64x22xbf16>, vector<64x22xf32> -> vector<64x22xf32>
    %127 = vector.extract_strided_slice %126 {offsets = [0, 0], sizes = [32, 22], strides = [1, 1]} : vector<64x22xf32> to vector<32x22xf32>
    %128 = math.tanh %127 : vector<32x22xf32>
    %129 = vector.extract_strided_slice %126 {offsets = [32, 0], sizes = [32, 22], strides = [1, 1]} : vector<64x22xf32> to vector<32x22xf32>
    %130 = arith.negf %129 : vector<32x22xf32>
    %131 = math.exp %130 : vector<32x22xf32>
    %cst_50 = arith.constant 1.000000e+00 : f32
    %132 = vector.broadcast %cst_50 : f32 to vector<32x22xf32>
    %133 = arith.addf %132, %131 : vector<32x22xf32>
    %134 = arith.divf %132, %133 : vector<32x22xf32>
    %135 = arith.mulf %128, %134 : vector<32x22xf32>
    %c4_51 = arith.constant 4 : index
    %c0_52 = arith.constant 0 : index
    %c0_53 = arith.constant 0 : index
    %136 = vector.load %arg3[%c4_51, %c0_52, %c0_53] : memref<6x64x32xbf16, #tpu.memory_space<vmem>>, vector<1x64x32xbf16>
    %137 = vector.shape_cast %136 : vector<1x64x32xbf16> to vector<64x32xbf16>
    %138 = arith.truncf %135 : vector<32x22xf32> to vector<32x22xbf16>
    %cst_54 = arith.constant dense<0.000000e+00> : vector<64x22xf32>
    %139 = tpu.matmul %137, %138, %cst_54 {dimension_numbers = #tpu.dot_dimension_numbers<[1], [0], [0], [1], [0, 0, 1, 1], [], []>} : vector<64x32xbf16>, vector<32x22xbf16>, vector<64x22xf32> -> vector<64x22xf32>
    %c4_55 = arith.constant 4 : index
    %c0_56 = arith.constant 0 : index
    %c0_57 = arith.constant 0 : index
    %140 = vector.load %arg4[%c4_55, %c0_56, %c0_57] : memref<6x64x1xf32, #tpu.memory_space<vmem>>, vector<1x64x1xf32>
    %141 = vector.shape_cast %140 : vector<1x64x1xf32> to vector<64x1xf32>
    %142 = vector.broadcast %141 : vector<64x1xf32> to vector<64x22xf32>
    %143 = arith.addf %139, %142 : vector<64x22xf32>
    %144 = vector.extract_strided_slice %143 {offsets = [0, 0], sizes = [32, 22], strides = [1, 1]} : vector<64x22xf32> to vector<32x22xf32>
    %145 = arith.addf %144, %119 : vector<32x22xf32>
    %146 = vector.extract_strided_slice %143 {offsets = [32, 4], sizes = [32, 18], strides = [1, 1]} : vector<64x22xf32> to vector<32x18xf32>
    %147 = arith.addf %118, %146 : vector<32x18xf32>
    %148 = arith.truncf %145 : vector<32x22xf32> to vector<32x22xbf16>
    %149 = vector.extract_strided_slice %148 {offsets = [0, 0], sizes = [32, 18], strides = [1, 1]} : vector<32x22xbf16> to vector<32x18xbf16>
    %150 = vector.extract_strided_slice %148 {offsets = [0, 4], sizes = [32, 18], strides = [1, 1]} : vector<32x22xbf16> to vector<32x18xbf16>
    %151 = tpu.concatenate %149, %150 in 0 : vector<32x18xbf16>, vector<32x18xbf16> -> vector<64x18xbf16>
    %c5 = arith.constant 5 : index
    %c0_58 = arith.constant 0 : index
    %c0_59 = arith.constant 0 : index
    %152 = vector.load %arg2[%c5, %c0_58, %c0_59] : memref<6x64x64xbf16, #tpu.memory_space<vmem>>, vector<1x64x64xbf16>
    %153 = vector.shape_cast %152 : vector<1x64x64xbf16> to vector<64x64xbf16>
    %cst_60 = arith.constant dense<0.000000e+00> : vector<64x18xf32>
    %154 = tpu.matmul %153, %151, %cst_60 {dimension_numbers = #tpu.dot_dimension_numbers<[1], [0], [0], [1], [0, 0, 1, 1], [], []>} : vector<64x64xbf16>, vector<64x18xbf16>, vector<64x18xf32> -> vector<64x18xf32>
    %155 = vector.extract_strided_slice %154 {offsets = [0, 0], sizes = [32, 18], strides = [1, 1]} : vector<64x18xf32> to vector<32x18xf32>
    %156 = math.tanh %155 : vector<32x18xf32>
    %157 = vector.extract_strided_slice %154 {offsets = [32, 0], sizes = [32, 18], strides = [1, 1]} : vector<64x18xf32> to vector<32x18xf32>
    %158 = arith.negf %157 : vector<32x18xf32>
    %159 = math.exp %158 : vector<32x18xf32>
    %cst_61 = arith.constant 1.000000e+00 : f32
    %160 = vector.broadcast %cst_61 : f32 to vector<32x18xf32>
    %161 = arith.addf %160, %159 : vector<32x18xf32>
    %162 = arith.divf %160, %161 : vector<32x18xf32>
    %163 = arith.mulf %156, %162 : vector<32x18xf32>
    %c5_62 = arith.constant 5 : index
    %c0_63 = arith.constant 0 : index
    %c0_64 = arith.constant 0 : index
    %164 = vector.load %arg3[%c5_62, %c0_63, %c0_64] : memref<6x64x32xbf16, #tpu.memory_space<vmem>>, vector<1x64x32xbf16>
    %165 = vector.shape_cast %164 : vector<1x64x32xbf16> to vector<64x32xbf16>
    %166 = arith.truncf %163 : vector<32x18xf32> to vector<32x18xbf16>
    %cst_65 = arith.constant dense<0.000000e+00> : vector<64x18xf32>
    %167 = tpu.matmul %165, %166, %cst_65 {dimension_numbers = #tpu.dot_dimension_numbers<[1], [0], [0], [1], [0, 0, 1, 1], [], []>} : vector<64x32xbf16>, vector<32x18xbf16>, vector<64x18xf32> -> vector<64x18xf32>
    %c5_66 = arith.constant 5 : index
    %c0_67 = arith.constant 0 : index
    %c0_68 = arith.constant 0 : index
    %168 = vector.load %arg4[%c5_66, %c0_67, %c0_68] : memref<6x64x1xf32, #tpu.memory_space<vmem>>, vector<1x64x1xf32>
    %169 = vector.shape_cast %168 : vector<1x64x1xf32> to vector<64x1xf32>
    %170 = vector.broadcast %169 : vector<64x1xf32> to vector<64x18xf32>
    %171 = arith.addf %167, %170 : vector<64x18xf32>
    %172 = vector.extract_strided_slice %171 {offsets = [32, 0], sizes = [32, 18], strides = [1, 1]} : vector<64x18xf32> to vector<32x18xf32>
    %173 = arith.addf %147, %172 : vector<32x18xf32>
    %cst_69 = arith.constant 0.000000e+00 : f32
    %174 = vector.broadcast %cst_69 : f32 to vector<32x18xf32>
    %175 = arith.maximumf %173, %174 : vector<32x18xf32>
    %c0_70 = arith.constant 0 : index
    %c0_71 = arith.constant 0 : index
    %176 = vector.load %arg5[%c0_70, %c0_71] : memref<32x32xbf16, #tpu.memory_space<vmem>>, vector<32x32xbf16>
    %177 = arith.truncf %175 : vector<32x18xf32> to vector<32x18xbf16>
    %cst_72 = arith.constant dense<0.000000e+00> : vector<32x18xf32>
    %178 = tpu.matmul %176, %177, %cst_72 {dimension_numbers = #tpu.dot_dimension_numbers<[1], [0], [0], [1], [0, 0, 1, 1], [], []>} : vector<32x32xbf16>, vector<32x18xbf16>, vector<32x18xf32> -> vector<32x18xf32>
    %c0_73 = arith.constant 0 : index
    %c0_74 = arith.constant 0 : index
    %179 = vector.load %arg6[%c0_73, %c0_74] : memref<32x1xf32, #tpu.memory_space<vmem>>, vector<32x1xf32>
    %180 = vector.broadcast %179 : vector<32x1xf32> to vector<32x18xf32>
    %181 = arith.addf %178, %180 : vector<32x18xf32>
    %cst_75 = arith.constant 0.000000e+00 : f32
    %182 = vector.broadcast %cst_75 : f32 to vector<32x18xf32>
    %183 = arith.maximumf %181, %182 : vector<32x18xf32>
    %c0_76 = arith.constant 0 : index
    %c0_77 = arith.constant 0 : index
    %184 = vector.load %arg7[%c0_76, %c0_77] : memref<16x32xbf16, #tpu.memory_space<vmem>>, vector<16x32xbf16>
    %185 = arith.truncf %183 : vector<32x18xf32> to vector<32x18xbf16>
    %cst_78 = arith.constant dense<0.000000e+00> : vector<16x18xf32>
    %186 = tpu.matmul %184, %185, %cst_78 {dimension_numbers = #tpu.dot_dimension_numbers<[1], [0], [0], [1], [0, 0, 1, 1], [], []>} : vector<16x32xbf16>, vector<32x18xbf16>, vector<16x18xf32> -> vector<16x18xf32>
    %c0_79 = arith.constant 0 : index
    %c0_80 = arith.constant 0 : index
    %187 = vector.load %arg8[%c0_79, %c0_80] : memref<16x1xf32, #tpu.memory_space<vmem>>, vector<16x1xf32>
    %188 = vector.broadcast %187 : vector<16x1xf32> to vector<16x18xf32>
    %189 = arith.addf %186, %188 : vector<16x18xf32>
    %c0_81 = arith.constant 0 : index
    %c0_82 = arith.constant 0 : index
    %c0_83 = arith.constant 0 : index
    %190 = vector.load %arg9[%c0_81, %c0_82, %c0_83] : memref<1x16x18xf32, #tpu.memory_space<vmem>>, vector<1x16x18xf32>
    %191 = vector.shape_cast %190 : vector<1x16x18xf32> to vector<16x18xf32>
    %192 = vector.shape_cast %189 : vector<16x18xf32> to vector<1x16x18xf32>
    tpu.vector_store %arg9[%c0_81, %c0_82, %c0_83], %192 {strides = array<i32>} : memref<1x16x18xf32, #tpu.memory_space<vmem>>, vector<1x16x18xf32>,
    return
  }
  func.func @transform_0(%arg0: i32) -> (i32, i32, i32) {
    %c0_i32 = arith.constant 0 : i32
    %c0_i32_0 = arith.constant 0 : i32
    %c0_i32_1 = arith.constant 0 : i32
    return %arg0, %c0_i32, %c0_i32_0 : i32, i32, i32
  }
  func.func @transform_1(%arg0: i32) -> (i32, i32, i32) {
    %c0_i32 = arith.constant 0 : i32
    %c0_i32_0 = arith.constant 0 : i32
    %c0_i32_1 = arith.constant 0 : i32
    %c0_i32_2 = arith.constant 0 : i32
    return %c0_i32, %c0_i32_0, %c0_i32_1 : i32, i32, i32
  }
  func.func @transform_2(%arg0: i32) -> (i32, i32, i32) {
    %c0_i32 = arith.constant 0 : i32
    %c0_i32_0 = arith.constant 0 : i32
    %c0_i32_1 = arith.constant 0 : i32
    %c0_i32_2 = arith.constant 0 : i32
    return %c0_i32, %c0_i32_0, %c0_i32_1 : i32, i32, i32
  }
  func.func @transform_3(%arg0: i32) -> (i32, i32, i32) {
    %c0_i32 = arith.constant 0 : i32
    %c0_i32_0 = arith.constant 0 : i32
    %c0_i32_1 = arith.constant 0 : i32
    %c0_i32_2 = arith.constant 0 : i32
    return %c0_i32, %c0_i32_0, %c0_i32_1 : i32, i32, i32
  }
  func.func @transform_4(%arg0: i32) -> (i32, i32) {
    %c0_i32 = arith.constant 0 : i32
    %c0_i32_0 = arith.constant 0 : i32
    %c0_i32_1 = arith.constant 0 : i32
    return %c0_i32, %c0_i32_0 : i32, i32
  }
  func.func @transform_5(%arg0: i32) -> (i32, i32) {
    %c0_i32 = arith.constant 0 : i32
    %c0_i32_0 = arith.constant 0 : i32
    %c0_i32_1 = arith.constant 0 : i32
    return %c0_i32, %c0_i32_0 : i32, i32
  }
  func.func @transform_6(%arg0: i32) -> (i32, i32) {
    %c0_i32 = arith.constant 0 : i32
    %c0_i32_0 = arith.constant 0 : i32
    %c0_i32_1 = arith.constant 0 : i32
    return %c0_i32, %c0_i32_0 : i32, i32
  }
  func.func @transform_7(%arg0: i32) -> (i32, i32) {
    %c0_i32 = arith.constant 0 : i32
    %c0_i32_0 = arith.constant 0 : i32
    %c0_i32_1 = arith.constant 0 : i32
    return %c0_i32, %c0_i32_0 : i32, i32
  }
  func.func @transform_8(%arg0: i32) -> (i32, i32, i32) {
    %c0_i32 = arith.constant 0 : i32
    %c0_i32_0 = arith.constant 0 : i32
    %c0_i32_1 = arith.constant 0 : i32
    return %arg0, %c0_i32, %c0_i32_0 : i32, i32, i32
  }
}

</mosaic_0001>

<llo_original>
// kernel: _lambda_.1
$region0: #{_lambda_.1}
  #allocation0 [shape = 'u32[]', space=smem, size = 0x4, offset = 0x4, fixed_abs, tag = 'smem constant byte address 0x4 - core index']
  #allocation1 [shape = 'u32[144,128]{1,0:T(1,128)}', space=vmem, size = 0x12000, scoped, tag = 'internal scratch']
  %s0 = inlined_call_operand.vmem [shape: f32[2,32,32], index: 0, kind: input, shape index: {}]
  %s1 = inlined_call_operand.vmem [shape: bf16[6,64,64], index: 1, kind: input, shape index: {}]
  %s2 = inlined_call_operand.hbm [shape: bf16[6,64,32], index: 2, kind: input, shape index: {}]
  %s3 = inlined_call_operand.vmem [shape: f32[6,64,1], index: 3, kind: input, shape index: {}]
  %s4 = inlined_call_operand.vmem [shape: bf16[32,32], index: 4, kind: input, shape index: {}]
  %s5 = inlined_call_operand.vmem [shape: f32[32,1], index: 5, kind: input, shape index: {}]
  %s6 = inlined_call_operand.vmem [shape: bf16[16,32], index: 6, kind: input, shape index: {}]
  %s7 = inlined_call_operand.vmem [shape: f32[16,1], index: 7, kind: input, shape index: {}]
  %s8 = inlined_call_operand.hbm [shape: f32[2,16,18], index: 8, kind: output, shape index: {}]
  %s9 = sld [smem:[#allocation0]]
  $region69: #{_lambda_.1} parent=0
    _
  %s11 = ssub.s32 1, %s9
  %s12 = scalar_select 0, %s11, %s9
  $region1: #{_lambda_.1} parent=0
    #allocation2 [shape = 'u8[98304]{0}', space=vmem, size = 0x18000, scoped, tag = 'input window, operand 2, single buffered']
    #allocation3 [shape = 's32[2]{0}', space=sflag, size = 0x8, scoped, tag = 'scoped memory for _lambda_.1']
    #allocation4 [shape = 's32[2]{0}', space=sflag, size = 0x8, scoped, tag = 'scoped memory for _lambda_.1']
    #allocation5 [shape = 'u8[16384]{0}', space=vmem, size = 0x4000, scoped, tag = 'output window, operand 0']
    %13 = vsyncpa [#allocation3], 0
    %14 = vsyncpa [#allocation4], 0
    %s15 = scalar_lea.sflag [#allocation4], 1
    %16 = vsyncpa %s15, 0
    loop: start=0, step=1, limit=4
    $region2: #{_lambda_.1} parent=1 // loop_pre_header
      _
    $region3: #{_lambda_.1} parent=1 // loop_header
      %s18 = sphi 0, %s22
      %p19 = scmp.ge.s32.totalorder %s18, 4
      %s28 = sphi 0, %s30
      %s31 = sphi 0, %s28
      %s32 = sphi 0, %s31
      %s48 = sphi 0, %s32
      %s52 = sphi 0, %s52
      %s54 = sphi 0, %s52
      %s55 = sphi 0, %s54
      %s69 = sphi 0, %s55
      %s73 = sphi 0, %s73
      %s75 = sphi 0, %s73
      %s76 = sphi 0, %s75
      %s90 = sphi 0, %s76
      %s94 = sphi 0, %s94
      %s96 = sphi 0, %s94
      %s97 = sphi 0, %s96
      %s111 = sphi 0, %s97
      %s115 = sphi 0, %s115
      %s117 = sphi 0, %s115
      %s118 = sphi 0, %s117
      %s132 = sphi 0, %s118
      %s136 = sphi 0, %s136
      %s138 = sphi 0, %s136
      %s139 = sphi 0, %s138
      %s153 = sphi 0, %s139
      %s157 = sphi 0, %s157
      %s159 = sphi 0, %s157
      %s160 = sphi 0, %s159
      %s174 = sphi 0, %s160
      %s178 = sphi 0, %s178
      %s180 = sphi 0, %s178
      %s181 = sphi 0, %s180
      %s195 = sphi 0, %s181
      %s201 = sphi 0, %s203
      %s204 = sphi 0, %s201
      %s205 = sphi 0, %s204
      %s221 = sphi 0, %s205
    $region4: #{_lambda_.1} parent=1 // loop_header_branch
      %21 = sbr.rel (%p19) target = $region8
    $region5: #{_lambda_.1} parent=1 // loop_body
      %s23 = ssub.s32 %s18, 1
      %s24 = ssub.s32 %s18, 2
      %s25 = sadd.s32 %s18, 1
      %s26 = ssub.s32 %s18, %s25
      %p27 = scmp.eq.s32.totalorder %s26, 0
      %s29 = sadd.s32 %s28, 1
      %s30 = scalar_select %p27, %s28, %s29
      %p33 = pneg %p27
      %p34 = scmp.eq.s32.totalorder %s18, 1
      %p35 = por %p33, %p34
      %p36 = scmp.ne.s32.totalorder %s28, %s31
      %p37 = scmp.eq.s32.totalorder %s18, 0
      %p38 = por %p36, %p37
      %p39 = scmp.ne.s32.totalorder %s28, %s31
      %p40 = scmp.eq.s32.totalorder %s23, 1
      %p41 = por %p39, %p40
      %p42 = scmp.ne.s32.totalorder %s31, %s32
      %p43 = scmp.eq.s32.totalorder %s23, 0
      %p44 = por %p42, %p43
      %p45 = scmp.ne.s32.totalorder %s31, %s32
      %p46 = scmp.eq.s32.totalorder %s24, 1
      %p47 = por %p45, %p46
      %p49 = scmp.ne.s32.totalorder %s32, %s48
      %p50 = scmp.eq.s32.totalorder %s24, 0
      %p51 = por %p49, %p50
      %s53 = sadd.s32 %s52, 1
      %p56 = scmp.eq.s32.totalorder %s18, 1
      %p57 = scmp.ne.s32.totalorder %s52, %s54
      %p58 = scmp.eq.s32.totalorder %s18, 0
      %p59 = por %p57, %p58
      %p60 = scmp.ne.s32.totalorder %s52, %s54
      %p61 = scmp.eq.s32.totalorder %s23, 1
      %p62 = por %p60, %p61
      %p63 = scmp.ne.s32.totalorder %s54, %s55
      %p64 = scmp.eq.s32.totalorder %s23, 0
      %p65 = por %p63, %p64
      %p66 = scmp.ne.s32.totalorder %s54, %s55
      %p67 = scmp.eq.s32.totalorder %s24, 1
      %p68 = por %p66, %p67
      %p70 = scmp.ne.s32.totalorder %s55, %s69
      %p71 = scmp.eq.s32.totalorder %s24, 0
      %p72 = por %p70, %p71
      %s74 = sadd.s32 %s73, 1
      %p77 = scmp.eq.s32.totalorder %s18, 1
      %p78 = scmp.ne.s32.totalorder %s73, %s75
      %p79 = scmp.eq.s32.totalorder %s18, 0
      %p80 = por %p78, %p79
      %p81 = scmp.ne.s32.totalorder %s73, %s75
      %p82 = scmp.eq.s32.totalorder %s23, 1
      %p83 = por %p81, %p82
      %p84 = scmp.ne.s32.totalorder %s75, %s76
      %p85 = scmp.eq.s32.totalorder %s23, 0
      %p86 = por %p84, %p85
      %p87 = scmp.ne.s32.totalorder %s75, %s76
      %p88 = scmp.eq.s32.totalorder %s24, 1
      %p89 = por %p87, %p88
      %p91 = scmp.ne.s32.totalorder %s76, %s90
      %p92 = scmp.eq.s32.totalorder %s24, 0
      %p93 = por %p91, %p92
      %s95 = sadd.s32 %s94, 1
      %p98 = scmp.eq.s32.totalorder %s18, 1
      %p99 = scmp.ne.s32.totalorder %s94, %s96
      %p100 = scmp.eq.s32.totalorder %s18, 0
      %p101 = por %p99, %p100
      %p102 = scmp.ne.s32.totalorder %s94, %s96
      %p103 = scmp.eq.s32.totalorder %s23, 1
      %p104 = por %p102, %p103
      %p105 = scmp.ne.s32.totalorder %s96, %s97
      %p106 = scmp.eq.s32.totalorder %s23, 0
      %p107 = por %p105, %p106
      %p108 = scmp.ne.s32.totalorder %s96, %s97
      %p109 = scmp.eq.s32.totalorder %s24, 1
      %p110 = por %p108, %p109
      %p112 = scmp.ne.s32.totalorder %s97, %s111
      %p113 = scmp.eq.s32.totalorder %s24, 0
      %p114 = por %p112, %p113
      %s116 = sadd.s32 %s115, 1
      %p119 = scmp.eq.s32.totalorder %s18, 1
      %p120 = scmp.ne.s32.totalorder %s115, %s117
      %p121 = scmp.eq.s32.totalorder %s18, 0
      %p122 = por %p120, %p121
      %p123 = scmp.ne.s32.totalorder %s115, %s117
      %p124 = scmp.eq.s32.totalorder %s23, 1
      %p125 = por %p123, %p124
      %p126 = scmp.ne.s32.totalorder %s117, %s118
      %p127 = scmp.eq.s32.totalorder %s23, 0
      %p128 = por %p126, %p127
      %p129 = scmp.ne.s32.totalorder %s117, %s118
      %p130 = scmp.eq.s32.totalorder %s24, 1
      %p131 = por %p129, %p130
      %p133 = scmp.ne.s32.totalorder %s118, %s132
      %p134 = scmp.eq.s32.totalorder %s24, 0
      %p135 = por %p133, %p134
      %s137 = sadd.s32 %s136, 1
      %p140 = scmp.eq.s32.totalorder %s18, 1
      %p141 = scmp.ne.s32.totalorder %s136, %s138
      %p142 = scmp.eq.s32.totalorder %s18, 0
      %p143 = por %p141, %p142
      %p144 = scmp.ne.s32.totalorder %s136, %s138
      %p145 = scmp.eq.s32.totalorder %s23, 1
      %p146 = por %p144, %p145
      %p147 = scmp.ne.s32.totalorder %s138, %s139
      %p148 = scmp.eq.s32.totalorder %s23, 0
      %p149 = por %p147, %p148
      %p150 = scmp.ne.s32.totalorder %s138, %s139
      %p151 = scmp.eq.s32.totalorder %s24, 1
      %p152 = por %p150, %p151
      %p154 = scmp.ne.s32.totalorder %s139, %s153
      %p155 = scmp.eq.s32.totalorder %s24, 0
      %p156 = por %p154, %p155
      %s158 = sadd.s32 %s157, 1
      %p161 = scmp.eq.s32.totalorder %s18, 1
      %p162 = scmp.ne.s32.totalorder %s157, %s159
      %p163 = scmp.eq.s32.totalorder %s18, 0
      %p164 = por %p162, %p163
      %p165 = scmp.ne.s32.totalorder %s157, %s159
      %p166 = scmp.eq.s32.totalorder %s23, 1
      %p167 = por %p165, %p166
      %p168 = scmp.ne.s32.totalorder %s159, %s160
      %p169 = scmp.eq.s32.totalorder %s23, 0
      %p170 = por %p168, %p169
      %p171 = scmp.ne.s32.totalorder %s159, %s160
      %p172 = scmp.eq.s32.totalorder %s24, 1
      %p173 = por %p171, %p172
      %p175 = scmp.ne.s32.totalorder %s160, %s174
      %p176 = scmp.eq.s32.totalorder %s24, 0
      %p177 = por %p175, %p176
      %s179 = sadd.s32 %s178, 1
      %p182 = scmp.eq.s32.totalorder %s18, 1
      %p183 = scmp.ne.s32.totalorder %s178, %s180
      %p184 = scmp.eq.s32.totalorder %s18, 0
      %p185 = por %p183, %p184
      %p186 = scmp.ne.s32.totalorder %s178, %s180
      %p187 = scmp.eq.s32.totalorder %s23, 1
      %p188 = por %p186, %p187
      %p189 = scmp.ne.s32.totalorder %s180, %s181
      %p190 = scmp.eq.s32.totalorder %s23, 0
      %p191 = por %p189, %p190
      %p192 = scmp.ne.s32.totalorder %s180, %s181
      %p193 = scmp.eq.s32.totalorder %s24, 1
      %p194 = por %p192, %p193
      %p196 = scmp.ne.s32.totalorder %s181, %s195
      %p197 = scmp.eq.s32.totalorder %s24, 0
      %p198 = por %p196, %p197
      %s199 = ssub.s32 %s18, %s25
      %p200 = scmp.eq.s32.totalorder %s199, 0
      %s202 = sadd.s32 %s201, 1
      %s203 = scalar_select %p200, %s201, %s202
      %p206 = pneg %p200
      %p207 = scmp.eq.s32.totalorder %s18, 1
      %p208 = por %p206, %p207
      %p209 = scmp.ne.s32.totalorder %s201, %s204
      %p210 = scmp.eq.s32.totalorder %s18, 0
      %p211 = por %p209, %p210
      %p212 = scmp.ne.s32.totalorder %s201, %s204
      %p213 = scmp.eq.s32.totalorder %s23, 1
      %p214 = por %p212, %p213
      %p215 = scmp.ne.s32.totalorder %s204, %s205
      %p216 = scmp.eq.s32.totalorder %s23, 0
      %p217 = por %p215, %p216
      %p218 = scmp.ne.s32.totalorder %s204, %s205
      %p219 = scmp.eq.s32.totalorder %s24, 1
      %p220 = por %p218, %p219
      %p222 = scmp.ne.s32.totalorder %s205, %s221
      %p223 = scmp.eq.s32.totalorder %s24, 0
      %p224 = por %p222, %p223
      %p225 = scmp.le.s32.totalorder 1, %s18
      %p226 = scmp.lt.s32.totalorder %s18, 3
      %p227 = pnand %p225, %p226
      %p228 = pneg %p227
      // Predicated region
      $region9: #{_lambda_.1} parent=5 // pred_check
        _
      $region10: #{_lambda_.1} parent=5 // pred_check_branch
        %230 = sbr.rel (%p227) target = $region12
      $region11: #{_lambda_.1} parent=5 // pred_region
        %s231 = ssub.s32 %s18, 1
        // Predicated region
        $region13: #{_lambda_.1} parent=11 // pred_check
          %p232 = pneg %p65
        $region14: #{_lambda_.1} parent=11 // pred_check_branch
          %234 = sbr.rel (%p232) target = $region16
        $region15: #{_lambda_.1} parent=11 // pred_region
          _
        $region16: #{_lambda_.1} parent=11 // pred_fallthru
          _
        // Predicated region
        $region17: #{_lambda_.1} parent=11 // pred_check
          %p235 = pneg %p86
        $region18: #{_lambda_.1} parent=11 // pred_check_branch
          %237 = sbr.rel (%p235) target = $region20
        $region19: #{_lambda_.1} parent=11 // pred_region
          %s239 = ssub.s32 3072, 3072
          %240 = vsyncadd [#allocation3], %s239
          %s241 = sshll.u32 [#allocation2], 4
          %s242 = int_to_ptr.vmem [resolvable:$true] %s241
          %247 = dma.hbm_to_vmem [thread:$0]  %s2, 3072, %s242, [#allocation3], 64, 64, 4
        $region20: #{_lambda_.1} parent=11 // pred_fallthru
          _
        // Predicated region
        $region21: #{_lambda_.1} parent=11 // pred_check
          %p248 = pneg %p107
        $region22: #{_lambda_.1} parent=11 // pred_check_branch
          %250 = sbr.rel (%p248) target = $region24
        $region23: #{_lambda_.1} parent=11 // pred_region
          _
        $region24: #{_lambda_.1} parent=11 // pred_fallthru
          _
        // Predicated region
        $region25: #{_lambda_.1} parent=11 // pred_check
          %p251 = pneg %p128
        $region26: #{_lambda_.1} parent=11 // pred_check_branch
          %253 = sbr.rel (%p251) target = $region28
        $region27: #{_lambda_.1} parent=11 // pred_region
          _
        $region28: #{_lambda_.1} parent=11 // pred_fallthru
          _
        // Predicated region
        $region29: #{_lambda_.1} parent=11 // pred_check
          %p254 = pneg %p149
        $region30: #{_lambda_.1} parent=11 // pred_check_branch
          %256 = sbr.rel (%p254) target = $region32
        $region31: #{_lambda_.1} parent=11 // pred_region
          _
        $region32: #{_lambda_.1} parent=11 // pred_fallthru
          _
        // Predicated region
        $region33: #{_lambda_.1} parent=11 // pred_check
          %p257 = pneg %p170
        $region34: #{_lambda_.1} parent=11 // pred_check_branch
          %259 = sbr.rel (%p257) target = $region36
        $region35: #{_lambda_.1} parent=11 // pred_region
          _
        $region36: #{_lambda_.1} parent=11 // pred_fallthru
          _
        // Predicated region
        $region37: #{_lambda_.1} parent=11 // pred_check
          %p260 = pneg %p191
        $region38: #{_lambda_.1} parent=11 // pred_check_branch
          %262 = sbr.rel (%p260) target = $region40
        $region39: #{_lambda_.1} parent=11 // pred_region
          _
        $region40: #{_lambda_.1} parent=11 // pred_fallthru
          _
      $region12: #{_lambda_.1} parent=5 // pred_fallthru
        _
      %p263 = scmp.lt.s32.totalorder %s18, 2
      // Predicated region
      $region41: #{_lambda_.1} parent=5 // pred_check
        %p264 = pneg %p263
      $region42: #{_lambda_.1} parent=5 // pred_check_branch
        %266 = sbr.rel (%p264) target = $region44
      $region43: #{_lambda_.1} parent=5 // pred_region
        // Predicated region
        $region45: #{_lambda_.1} parent=43 // pred_check
          %p267 = pneg %p38
        $region46: #{_lambda_.1} parent=43 // pred_check_branch
          %269 = sbr.rel (%p267) target = $region48
        $region47: #{_lambda_.1} parent=43 // pred_region
          %p270 = scmp.lt.s32.totalorder %s18, 1
          %s271 = scalar_select %p270, %s18, 1
          %s272 = smul.addr %s271, 4
          %s273 = smul.addr %s272, 8
          %s274 = scalar_lea.vmem %s0, %s273
        $region48: #{_lambda_.1} parent=43 // pred_fallthru
          _
      $region44: #{_lambda_.1} parent=5 // pred_fallthru
        _
      %p275 = scmp.le.s32.totalorder 1, %s18
      %p276 = scmp.lt.s32.totalorder %s18, 3
      %p277 = pnand %p275, %p276
      %p278 = pneg %p277
      // Predicated region
      $region49: #{_lambda_.1} parent=5 // pred_check
        _
      $region50: #{_lambda_.1} parent=5 // pred_check_branch
        %280 = sbr.rel (%p277) target = $region52
      $region51: #{_lambda_.1} parent=5 // pred_region
        %s281 = ssub.s32 %s18, 1
        // Predicated region
        $region53: #{_lambda_.1} parent=51 // pred_check
          %p282 = pneg %p86
        $region54: #{_lambda_.1} parent=51 // pred_check_branch
          %284 = sbr.rel (%p282) target = $region56
        $region55: #{_lambda_.1} parent=51 // pred_region
          %285 = dma.done [#allocation3], 3072
        $region56: #{_lambda_.1} parent=51 // pred_fallthru
          _
        %p286 = scmp.lt.s32.totalorder %s23, 1
        %s287 = scalar_select %p286, %s23, 1
        %s288 = smul.addr %s287, 4
        %s289 = smul.addr %s288, 8
        %s290 = scalar_lea.vmem %s0, %s289
        %p291 = pneg %p44
        %p292 = pneg %p41
        %p293 = pneg %p65
        %p294 = pneg %p62
        %p295 = pneg %p86
        %p296 = pneg %p83
        %p297 = pneg %p107
        %p298 = pneg %p104
        %p299 = pneg %p128
        %p300 = pneg %p125
        %p301 = pneg %p149
        %p302 = pneg %p146
        %p303 = pneg %p170
        %p304 = pneg %p167
        %p305 = pneg %p191
        %p306 = pneg %p188
        %p307 = pneg %p217
        %p308 = pneg %p214
        %s309 = sand.u32 %s204, 1
        %s310 = scalar_lea.sflag [#allocation4], %s309
        %s311 = sand.u32 %s204, 1
        %s312 = smul.addr %s311, 16
        %s313 = scalar_lea.vmem [#allocation5], %s312
        %p314 = scmp.lt.s32.totalorder %s23, 1
        %s315 = scalar_select %p314, %s23, 1
        %s316 = smul.addr %s315, 4
        %s317 = smul.addr %s316, 8
        %s318 = scalar_lea.vmem %s0, %s317
        %v320 = vld [vmem:[%s318] sm:$0xff]
        %v321 = vld [vmem:[%s318 + $0x8] sm:$0xff]
        %v322 = vld [vmem:[%s318 + $0x10] sm:$0xff]
        %v323 = vld [vmem:[%s318 + $0x18] sm:$0xff]
        %v324 = vpack.c.bf16 %v321, %v320
        %v325 = vpack.c.bf16 %v323, %v322
        %328 = vrot.lane.b32.xlu0 %v324, 127
        %v329 = vpop.permute.xlu0 %328
        %330 = vrot.lane.b32.xlu0 %v325, 127
        %v331 = vpop.permute.xlu0 %330
        %v334 = vld [vmem:[%s1] sm:$0xf]
        %v335 = vld [vmem:[%s1 + $0x4] sm:$0xf]
        %v336 = vld [vmem:[%s1 + $0x8] sm:$0xf]
        %v337 = vld [vmem:[%s1 + $0xc] sm:$0xf]
        %v338 = vld [vmem:[%s1 + $0x10] sm:$0xf]
        %v339 = vld [vmem:[%s1 + $0x14] sm:$0xf]
        %v340 = vld [vmem:[%s1 + $0x18] sm:$0xf]
        %v341 = vld [vmem:[%s1 + $0x1c] sm:$0xf]
        %v350 = vunpack.c.l.b16 %v334
        %v351 = vunpack.c.l.b16 %v335
        %v352 = vunpack.c.l.b16 %v336
        %v353 = vunpack.c.l.b16 %v337
        %v354 = vunpack.c.l.b16 %v338
        %v355 = vunpack.c.l.b16 %v339
        %v356 = vunpack.c.l.b16 %v340
        %v357 = vunpack.c.l.b16 %v341
        %v358 = vpack.c.b16 %v351, %v350
        %v359 = vpack.c.b16 %v353, %v352
        %v360 = vpack.c.b16 %v355, %v354
        %v361 = vpack.c.b16 %v357, %v356
        %vm362 = vcmask 523264
        %v364 = vsel %vm362, %v358, 0
        %v367 = vsel %vm362, %v359, 0
        %v370 = vsel %vm362, %v360, 0
        %v373 = vsel %vm362, %v361, 0
        %375 = vmatprep.subr.bf16.mxu0 0
        %376 = vmatpush1.bf16.msra.mxu0 %v324
        %377 = vmatprep.subr.bf16.mxu0 0
        %378 = vmatpush1.bf16.msra.mxu0 %v325
        %379 = vmatprep.subr.bf16.mxu0 0
        %380 = vmatpush1.bf16.msra.mxu0 %v329
        %381 = vmatprep.subr.bf16.mxu0 0
        %382 = vmatpush1.bf16.msra.mxu0 %v331
        %383 = vmatprep.subr.bf16.mxu0 0
        %384 = vmatpush1.bf16.msra.mxu0 0
        %385 = vmatprep.subr.bf16.mxu0 0
        %386 = vmatpush1.bf16.msra.mxu0 0
        %387 = vmatprep.subr.bf16.mxu0 0
        %388 = vmatpush1.bf16.msra.mxu0 0
        %389 = vmatprep.subr.bf16.mxu0 0
        %390 = vmatpush1.bf16.msra.mxu0 0
        %391 = vmatprep.subr.bf16.mxu0 0
        %392 = vmatpush1.bf16.msra.mxu0 0
        %393 = vmatprep.subr.bf16.mxu0 0
        %394 = vmatpush1.bf16.msra.mxu0 0
        %395 = vmatprep.subr.bf16.mxu0 0
        %396 = vmatpush1.bf16.msra.mxu0 0
        %397 = vmatprep.subr.bf16.mxu0 0
        %398 = vmatpush1.bf16.msra.mxu0 0
        %399 = vmatprep.subr.bf16.mxu0 0
        %400 = vmatpush1.bf16.msra.mxu0 0
        %401 = vmatprep.subr.bf16.mxu0 0
        %402 = vmatpush1.bf16.msra.mxu0 0
        %403 = vmatprep.subr.bf16.mxu0 0
        %404 = vmatpush1.bf16.msra.mxu0 0
        %405 = vmatprep.subr.bf16.mxu0 0
        %406 = vmatpush1.bf16.msra.mxu0 0
        %407 = vmatprep.mubr.bf16.mxu0 0
        %408 = vmatmul.mubr.bf16.gmra.mrb[0].mxu0 %v364
        %v409 = vpop.f32.mrb[0].mxu0
        %v410 = vadd.f32 0.0, %v409
        %v411 = vpop.f32.mrb[0].mxu0
        %v412 = vpop.f32.mrb[0].mxu0
        %v413 = vadd.f32 0.0, %v412
        %v414 = vpop.f32.mrb[0].mxu0
        %415 = vmatprep.mubr.bf16.mxu0 0
        %416 = vmatmul.mubr.bf16.gmra.mrb[0].mxu0 %v367
        %v417 = vpop.f32.mrb[0].mxu0
        %v418 = vadd.f32 0.0, %v417
        %v419 = vpop.f32.mrb[0].mxu0
        %v420 = vpop.f32.mrb[0].mxu0
        %v421 = vadd.f32 0.0, %v420
        %v422 = vpop.f32.mrb[0].mxu0
        %423 = vmatprep.mubr.bf16.mxu0 0
        %424 = vmatmul.mubr.bf16.gmra.mrb[0].mxu0 %v370
        %v425 = vpop.f32.mrb[0].mxu0
        %v426 = vadd.f32 0.0, %v425
        %v427 = vpop.f32.mrb[0].mxu0
        %v428 = vpop.f32.mrb[0].mxu0
        %v429 = vadd.f32 0.0, %v428
        %v430 = vpop.f32.mrb[0].mxu0
        %431 = vmatprep.mubr.bf16.mxu0 0
        %432 = vmatmul.mubr.bf16.gmra.mrb[0].mxu0 %v373
        %v433 = vpop.f32.mrb[0].mxu0
        %v434 = vadd.f32 0.0, %v433
        %v435 = vpop.f32.mrb[0].mxu0
        %v436 = vpop.f32.mrb[0].mxu0
        %v437 = vadd.f32 0.0, %v436
        %v438 = vpop.f32.mrb[0].mxu0
        %439 = vdwg.mxu0
        %v440 = vtanh.pop %v410
        %v441 = vtanh.pop %v413
        %v442 = vtanh.pop %v418
        %v443 = vtanh.pop %v421
        %v444 = vxor.u32 %v426, 2147483648
        %v445 = vxor.u32 %v429, 2147483648
        %v446 = vxor.u32 %v434, 2147483648
        %v447 = vxor.u32 %v437, 2147483648
        %v448 = vmul.f32 %v444, 1.442695
        %v449 = vpow.pop %v448
        %v450 = vmul.f32 %v445, 1.442695
        %v451 = vpow.pop %v450
        %v452 = vmul.f32 %v446, 1.442695
        %v453 = vpow.pop %v452
        %v454 = vmul.f32 %v447, 1.442695
        %v455 = vpow.pop %v454
        %v456 = vadd.f32 %v449, 1.0
        %v457 = vadd.f32 %v451, 1.0
        %v458 = vadd.f32 %v453, 1.0
        %v459 = vadd.f32 %v455, 1.0
        %v460 = vrcp.pop %v456
        %v461 = vmul.f32 1.0, %v460
        %v462 = vrcp.pop %v457
        %v463 = vmul.f32 1.0, %v462
        %v464 = vrcp.pop %v458
        %v465 = vmul.f32 1.0, %v464
        %v466 = vrcp.pop %v459
        %v467 = vmul.f32 1.0, %v466
        %v468 = vmul.f32 %v440, %v461
        %v469 = vmul.f32 %v441, %v463
        %v470 = vmul.f32 %v442, %v465
        %v471 = vmul.f32 %v443, %v467
        %v472 = vld [vmem:[#allocation2] sm:$0xf]
        %v473 = vld [vmem:[#allocation2 + $0x4] sm:$0xf]
        %v474 = vld [vmem:[#allocation2 + $0x8] sm:$0xf]
        %v475 = vld [vmem:[#allocation2 + $0xc] sm:$0xf]
        %v476 = vld [vmem:[#allocation2 + $0x10] sm:$0xf]
        %v477 = vld [vmem:[#allocation2 + $0x14] sm:$0xf]
        %v478 = vld [vmem:[#allocation2 + $0x18] sm:$0xf]
        %v479 = vld [vmem:[#allocation2 + $0x1c] sm:$0xf]
        %v480 = vpack.c.bf16 %v469, %v468
        %v481 = vpack.c.bf16 %v471, %v470
        %v482 = vld [vmem:[%s3] sm:$0xff]
        %v483 = vld [vmem:[%s3 + $0x8] sm:$0xff]
        %v484 = vld [vmem:[%s3 + $0x10] sm:$0xff]
        %v485 = vld [vmem:[%s3 + $0x18] sm:$0xff]
        %v486 = vld [vmem:[%s3 + $0x20] sm:$0xff]
        %v487 = vld [vmem:[%s3 + $0x28] sm:$0xff]
        %v488 = vld [vmem:[%s3 + $0x30] sm:$0xff]
        %v489 = vld [vmem:[%s3 + $0x38] sm:$0xff]
        %491 = vset.pattern.permute.xlu0 0
        %492 = vperm.xlu0 %491, %v482
        %v493 = vpop.permute.xlu0 %492
        %496 = vset.pattern.permute.xlu0 0
        %497 = vperm.xlu0 %496, %v483
        %v498 = vpop.permute.xlu0 %497
        %501 = vset.pattern.permute.xlu0 0
        %502 = vperm.xlu0 %501, %v484
        %v503 = vpop.permute.xlu0 %502
        %506 = vset.pattern.permute.xlu0 0
        %507 = vperm.xlu0 %506, %v485
        %v508 = vpop.permute.xlu0 %507
        %511 = vset.pattern.permute.xlu0 0
        %512 = vperm.xlu0 %511, %v486
        %v513 = vpop.permute.xlu0 %512
        %516 = vset.pattern.permute.xlu0 0
        %517 = vperm.xlu0 %516, %v487
        %v518 = vpop.permute.xlu0 %517
        %521 = vset.pattern.permute.xlu0 0
        %522 = vperm.xlu0 %521, %v488
        %v523 = vpop.permute.xlu0 %522
        %526 = vset.pattern.permute.xlu0 0
        %527 = vperm.xlu0 %526, %v489
        %v528 = vpop.permute.xlu0 %527
        %v538 = vunpack.c.l.b16 %v472
        %v539 = vunpack.c.l.b16 %v473
        %v540 = vunpack.c.l.b16 %v474
        %v541 = vunpack.c.l.b16 %v475
        %v542 = vunpack.c.l.b16 %v476
        %v543 = vunpack.c.l.b16 %v477
        %v544 = vunpack.c.l.b16 %v478
        %v545 = vunpack.c.l.b16 %v479
        %v546 = vpack.c.b16 %v539, %v538
        %v547 = vpack.c.b16 %v541, %v540
        %v548 = vpack.c.b16 %v543, %v542
        %v549 = vpack.c.b16 %v545, %v544
        %vm550 = vcmask 261120
        %v552 = vsel %vm550, %v546, 0
        %v555 = vsel %vm550, %v547, 0
        %v558 = vsel %vm550, %v548, 0
        %v561 = vsel %vm550, %v549, 0
        %563 = vmatprep.subr.bf16.mxu0 0
        %564 = vmatpush1.bf16.msra.mxu0 %v480
        %565 = vmatprep.subr.bf16.mxu0 0
        %566 = vmatpush1.bf16.msra.mxu0 %v481
        %567 = vmatprep.subr.bf16.mxu0 0
        %568 = vmatpush1.bf16.msra.mxu0 0
        %569 = vmatprep.subr.bf16.mxu0 0
        %570 = vmatpush1.bf16.msra.mxu0 0
        %571 = vmatprep.subr.bf16.mxu0 0
        %572 = vmatpush1.bf16.msra.mxu0 0
        %573 = vmatprep.subr.bf16.mxu0 0
        %574 = vmatpush1.bf16.msra.mxu0 0
        %575 = vmatprep.subr.bf16.mxu0 0
        %576 = vmatpush1.bf16.msra.mxu0 0
        %577 = vmatprep.subr.bf16.mxu0 0
        %578 = vmatpush1.bf16.msra.mxu0 0
        %579 = vmatprep.subr.bf16.mxu0 0
        %580 = vmatpush1.bf16.msra.mxu0 0
        %581 = vmatprep.subr.bf16.mxu0 0
        %582 = vmatpush1.bf16.msra.mxu0 0
        %583 = vmatprep.subr.bf16.mxu0 0
        %584 = vmatpush1.bf16.msra.mxu0 0
        %585 = vmatprep.subr.bf16.mxu0 0
        %586 = vmatpush1.bf16.msra.mxu0 0
        %587 = vmatprep.subr.bf16.mxu0 0
        %588 = vmatpush1.bf16.msra.mxu0 0
        %589 = vmatprep.subr.bf16.mxu0 0
        %590 = vmatpush1.bf16.msra.mxu0 0
        %591 = vmatprep.subr.bf16.mxu0 0
        %592 = vmatpush1.bf16.msra.mxu0 0
        %593 = vmatprep.subr.bf16.mxu0 0
        %594 = vmatpush1.bf16.msra.mxu0 0
        %595 = vmatprep.mubr.bf16.mxu0 0
        %596 = vmatmul.mubr.bf16.gmra.mrb[0].mxu0 %v552
        %v597 = vpop.f32.mrb[0].mxu0
        %v598 = vadd.f32 %v493, %v597
        %v599 = vpop.f32.mrb[0].mxu0
        %v600 = vpop.f32.mrb[0].mxu0
        %v601 = vadd.f32 %v498, %v600
        %v602 = vpop.f32.mrb[0].mxu0
        %603 = vmatprep.mubr.bf16.mxu0 0
        %604 = vmatmul.mubr.bf16.gmra.mrb[0].mxu0 %v555
        %v605 = vpop.f32.mrb[0].mxu0
        %v606 = vadd.f32 %v503, %v605
        %v607 = vpop.f32.mrb[0].mxu0
        %v608 = vpop.f32.mrb[0].mxu0
        %v609 = vadd.f32 %v508, %v608
        %v610 = vpop.f32.mrb[0].mxu0
        %611 = vmatprep.mubr.bf16.mxu0 0
        %612 = vmatmul.mubr.bf16.gmra.mrb[0].mxu0 %v558
        %v613 = vpop.f32.mrb[0].mxu0
        %v614 = vadd.f32 %v513, %v613
        %v615 = vpop.f32.mrb[0].mxu0
        %v616 = vpop.f32.mrb[0].mxu0
        %v617 = vadd.f32 %v518, %v616
        %v618 = vpop.f32.mrb[0].mxu0
        %619 = vmatprep.mubr.bf16.mxu0 0
        %620 = vmatmul.mubr.bf16.gmra.mrb[0].mxu0 %v561
        %v621 = vpop.f32.mrb[0].mxu0
        %v622 = vadd.f32 %v523, %v621
        %v623 = vpop.f32.mrb[0].mxu0
        %v624 = vpop.f32.mrb[0].mxu0
        %v625 = vadd.f32 %v528, %v624
        %v626 = vpop.f32.mrb[0].mxu0
        %627 = vdwg.mxu0
        %632 = vrot.lane.b32.xlu0 %v320, 127
        %v633 = vpop.permute.xlu0 %632
        %634 = vrot.lane.b32.xlu0 %v321, 127
        %v635 = vpop.permute.xlu0 %634
        %636 = vrot.lane.b32.xlu0 %v322, 127
        %v637 = vpop.permute.xlu0 %636
        %638 = vrot.lane.b32.xlu0 %v323, 127
        %v639 = vpop.permute.xlu0 %638
        %v644 = vadd.f32 %v598, %v633
        %v645 = vadd.f32 %v601, %v635
        %v646 = vadd.f32 %v606, %v637
        %v647 = vadd.f32 %v609, %v639
        %v648 = vadd.f32 %v614, 0.0
        %v649 = vadd.f32 %v617, 0.0
        %v650 = vadd.f32 %v622, 0.0
        %v651 = vadd.f32 %v625, 0.0
        %v652 = vpack.c.bf16 %v645, %v644
        %v653 = vpack.c.bf16 %v647, %v646
        %656 = vrot.lane.b32.xlu0 %v652, 126
        %v657 = vpop.permute.xlu0 %656
        %658 = vrot.lane.b32.xlu0 %v653, 126
        %v659 = vpop.permute.xlu0 %658
        %s662 = scalar_lea.vmem %s1, 32
        %v663 = vld [vmem:[%s662] sm:$0xf]
        %v664 = vld [vmem:[%s662 + $0x4] sm:$0xf]
        %v665 = vld [vmem:[%s662 + $0x8] sm:$0xf]
        %v666 = vld [vmem:[%s662 + $0xc] sm:$0xf]
        %v667 = vld [vmem:[%s662 + $0x10] sm:$0xf]
        %v668 = vld [vmem:[%s662 + $0x14] sm:$0xf]
        %v669 = vld [vmem:[%s662 + $0x18] sm:$0xf]
        %v670 = vld [vmem:[%s662 + $0x1c] sm:$0xf]
        %v679 = vunpack.c.l.b16 %v663
        %v680 = vunpack.c.l.b16 %v664
        %v681 = vunpack.c.l.b16 %v665
        %v682 = vunpack.c.l.b16 %v666
        %v683 = vunpack.c.l.b16 %v667
        %v684 = vunpack.c.l.b16 %v668
        %v685 = vunpack.c.l.b16 %v669
        %v686 = vunpack.c.l.b16 %v670
        %v687 = vpack.c.b16 %v680, %v679
        %v688 = vpack.c.b16 %v682, %v681
        %v689 = vpack.c.b16 %v684, %v683
        %v690 = vpack.c.b16 %v686, %v685
        %v692 = vsel %vm362, %v687, 0
        %v695 = vsel %vm362, %v688, 0
        %v698 = vsel %vm362, %v689, 0
        %v701 = vsel %vm362, %v690, 0
        %703 = vmatprep.subr.bf16.mxu0 0
        %704 = vmatpush1.bf16.msra.mxu0 %v652
        %705 = vmatprep.subr.bf16.mxu0 0
        %706 = vmatpush1.bf16.msra.mxu0 %v653
        %707 = vmatprep.subr.bf16.mxu0 0
        %708 = vmatpush1.bf16.msra.mxu0 %v657
        %709 = vmatprep.subr.bf16.mxu0 0
        %710 = vmatpush1.bf16.msra.mxu0 %v659
        %711 = vmatprep.subr.bf16.mxu0 0
        %712 = vmatpush1.bf16.msra.mxu0 0
        %713 = vmatprep.subr.bf16.mxu0 0
        %714 = vmatpush1.bf16.msra.mxu0 0
        %715 = vmatprep.subr.bf16.mxu0 0
        %716 = vmatpush1.bf16.msra.mxu0 0
        %717 = vmatprep.subr.bf16.mxu0 0
        %718 = vmatpush1.bf16.msra.mxu0 0
        %719 = vmatprep.subr.bf16.mxu0 0
        %720 = vmatpush1.bf16.msra.mxu0 0
        %721 = vmatprep.subr.bf16.mxu0 0
        %722 = vmatpush1.bf16.msra.mxu0 0
        %723 = vmatprep.subr.bf16.mxu0 0
        %724 = vmatpush1.bf16.msra.mxu0 0
        %725 = vmatprep.subr.bf16.mxu0 0
        %726 = vmatpush1.bf16.msra.mxu0 0
        %727 = vmatprep.subr.bf16.mxu0 0
        %728 = vmatpush1.bf16.msra.mxu0 0
        %729 = vmatprep.subr.bf16.mxu0 0
        %730 = vmatpush1.bf16.msra.mxu0 0
        %731 = vmatprep.subr.bf16.mxu0 0
        %732 = vmatpush1.bf16.msra.mxu0 0
        %733 = vmatprep.subr.bf16.mxu0 0
        %734 = vmatpush1.bf16.msra.mxu0 0
        %735 = vmatprep.mubr.bf16.mxu0 0
        %736 = vmatmul.mubr.bf16.gmra.mrb[0].mxu0 %v692
        %v737 = vpop.f32.mrb[0].mxu0
        %v738 = vadd.f32 0.0, %v737
        %v739 = vpop.f32.mrb[0].mxu0
        %v740 = vpop.f32.mrb[0].mxu0
        %v741 = vadd.f32 0.0, %v740
        %v742 = vpop.f32.mrb[0].mxu0
        %743 = vmatprep.mubr.bf16.mxu0 0
        %744 = vmatmul.mubr.bf16.gmra.mrb[0].mxu0 %v695
        %v745 = vpop.f32.mrb[0].mxu0
        %v746 = vadd.f32 0.0, %v745
        %v747 = vpop.f32.mrb[0].mxu0
        %v748 = vpop.f32.mrb[0].mxu0
        %v749 = vadd.f32 0.0, %v748
        %v750 = vpop.f32.mrb[0].mxu0
        %751 = vmatprep.mubr.bf16.mxu0 0
        %752 = vmatmul.mubr.bf16.gmra.mrb[0].mxu0 %v698
        %v753 = vpop.f32.mrb[0].mxu0
        %v754 = vadd.f32 0.0, %v753
        %v755 = vpop.f32.mrb[0].mxu0
        %v756 = vpop.f32.mrb[0].mxu0
        %v757 = vadd.f32 0.0, %v756
        %v758 = vpop.f32.mrb[0].mxu0
        %759 = vmatprep.mubr.bf16.mxu0 0
        %760 = vmatmul.mubr.bf16.gmra.mrb[0].mxu0 %v701
        %v761 = vpop.f32.mrb[0].mxu0
        %v762 = vadd.f32 0.0, %v761
        %v763 = vpop.f32.mrb[0].mxu0
        %v764 = vpop.f32.mrb[0].mxu0
        %v765 = vadd.f32 0.0, %v764
        %v766 = vpop.f32.mrb[0].mxu0
        %767 = vdwg.mxu0
        %v768 = vtanh.pop %v738
        %v769 = vtanh.pop %v741
        %v770 = vtanh.pop %v746
        %v771 = vtanh.pop %v749
        %v772 = vxor.u32 %v754, 2147483648
        %v773 = vxor.u32 %v757, 2147483648
        %v774 = vxor.u32 %v762, 2147483648
        %v775 = vxor.u32 %v765, 2147483648
        %v776 = vmul.f32 %v772, 1.442695
        %v777 = vpow.pop %v776
        %v778 = vmul.f32 %v773, 1.442695
        %v779 = vpow.pop %v778
        %v780 = vmul.f32 %v774, 1.442695
        %v781 = vpow.pop %v780
        %v782 = vmul.f32 %v775, 1.442695
        %v783 = vpow.pop %v782
        %v784 = vadd.f32 %v777, 1.0
        %v785 = vadd.f32 %v779, 1.0
        %v786 = vadd.f32 %v781, 1.0
        %v787 = vadd.f32 %v783, 1.0
        %v788 = vrcp.pop %v784
        %v789 = vmul.f32 1.0, %v788
        %v790 = vrcp.pop %v785
        %v791 = vmul.f32 1.0, %v790
        %v792 = vrcp.pop %v786
        %v793 = vmul.f32 1.0, %v792
        %v794 = vrcp.pop %v787
        %v795 = vmul.f32 1.0, %v794
        %v796 = vmul.f32 %v768, %v789
        %v797 = vmul.f32 %v769, %v791
        %v798 = vmul.f32 %v770, %v793
        %v799 = vmul.f32 %v771, %v795
        %s800 = scalar_lea.vmem [#allocation2], 32
        %v801 = vld [vmem:[%s800] sm:$0xf]
        %v802 = vld [vmem:[%s800 + $0x4] sm:$0xf]
        %v803 = vld [vmem:[%s800 + $0x8] sm:$0xf]
        %v804 = vld [vmem:[%s800 + $0xc] sm:$0xf]
        %v805 = vld [vmem:[%s800 + $0x10] sm:$0xf]
        %v806 = vld [vmem:[%s800 + $0x14] sm:$0xf]
        %v807 = vld [vmem:[%s800 + $0x18] sm:$0xf]
        %v808 = vld [vmem:[%s800 + $0x1c] sm:$0xf]
        %v809 = vpack.c.bf16 %v797, %v796
        %v810 = vpack.c.bf16 %v799, %v798
        %s811 = scalar_lea.vmem %s3, 64
        %v812 = vld [vmem:[%s811] sm:$0xff]
        %v813 = vld [vmem:[%s811 + $0x8] sm:$0xff]
        %v814 = vld [vmem:[%s811 + $0x10] sm:$0xff]
        %v815 = vld [vmem:[%s811 + $0x18] sm:$0xff]
        %v816 = vld [vmem:[%s811 + $0x20] sm:$0xff]
        %v817 = vld [vmem:[%s811 + $0x28] sm:$0xff]
        %v818 = vld [vmem:[%s811 + $0x30] sm:$0xff]
        %v819 = vld [vmem:[%s811 + $0x38] sm:$0xff]
        %821 = vset.pattern.permute.xlu0 0
        %822 = vperm.xlu0 %821, %v812
        %v823 = vpop.permute.xlu0 %822
        %826 = vset.pattern.permute.xlu0 0
        %827 = vperm.xlu0 %826, %v813
        %v828 = vpop.permute.xlu0 %827
        %831 = vset.pattern.permute.xlu0 0
        %832 = vperm.xlu0 %831, %v814
        %v833 = vpop.permute.xlu0 %832
        %836 = vset.pattern.permute.xlu0 0
        %837 = vperm.xlu0 %836, %v815
        %v838 = vpop.permute.xlu0 %837
        %841 = vset.pattern.permute.xlu0 0
        %842 = vperm.xlu0 %841, %v816
        %v843 = vpop.permute.xlu0 %842
        %846 = vset.pattern.permute.xlu0 0
        %847 = vperm.xlu0 %846, %v817
        %v848 = vpop.permute.xlu0 %847
        %851 = vset.pattern.permute.xlu0 0
        %852 = vperm.xlu0 %851, %v818
        %v853 = vpop.permute.xlu0 %852
        %856 = vset.pattern.permute.xlu0 0
        %857 = vperm.xlu0 %856, %v819
        %v858 = vpop.permute.xlu0 %857
        %v868 = vunpack.c.l.b16 %v801
        %v869 = vunpack.c.l.b16 %v802
        %v870 = vunpack.c.l.b16 %v803
        %v871 = vunpack.c.l.b16 %v804
        %v872 = vunpack.c.l.b16 %v805
        %v873 = vunpack.c.l.b16 %v806
        %v874 = vunpack.c.l.b16 %v807
        %v875 = vunpack.c.l.b16 %v808
        %v876 = vpack.c.b16 %v869, %v868
        %v877 = vpack.c.b16 %v871, %v870
        %v878 = vpack.c.b16 %v873, %v872
        %v879 = vpack.c.b16 %v875, %v874
        %v881 = vsel %vm550, %v876, 0
        %v884 = vsel %vm550, %v877, 0
        %v887 = vsel %vm550, %v878, 0
        %v890 = vsel %vm550, %v879, 0
        %892 = vmatprep.subr.bf16.mxu0 0
        %893 = vmatpush1.bf16.msra.mxu0 %v809
        %894 = vmatprep.subr.bf16.mxu0 0
        %895 = vmatpush1.bf16.msra.mxu0 %v810
        %896 = vmatprep.subr.bf16.mxu0 0
        %897 = vmatpush1.bf16.msra.mxu0 0
        %898 = vmatprep.subr.bf16.mxu0 0
        %899 = vmatpush1.bf16.msra.mxu0 0
        %900 = vmatprep.subr.bf16.mxu0 0
        %901 = vmatpush1.bf16.msra.mxu0 0
        %902 = vmatprep.subr.bf16.mxu0 0
        %903 = vmatpush1.bf16.msra.mxu0 0
        %904 = vmatprep.subr.bf16.mxu0 0
        %905 = vmatpush1.bf16.msra.mxu0 0
        %906 = vmatprep.subr.bf16.mxu0 0
        %907 = vmatpush1.bf16.msra.mxu0 0
        %908 = vmatprep.subr.bf16.mxu0 0
        %909 = vmatpush1.bf16.msra.mxu0 0
        %910 = vmatprep.subr.bf16.mxu0 0
        %911 = vmatpush1.bf16.msra.mxu0 0
        %912 = vmatprep.subr.bf16.mxu0 0
        %913 = vmatpush1.bf16.msra.mxu0 0
        %914 = vmatprep.subr.bf16.mxu0 0
        %915 = vmatpush1.bf16.msra.mxu0 0
        %916 = vmatprep.subr.bf16.mxu0 0
        %917 = vmatpush1.bf16.msra.mxu0 0
        %918 = vmatprep.subr.bf16.mxu0 0
        %919 = vmatpush1.bf16.msra.mxu0 0
        %920 = vmatprep.subr.bf16.mxu0 0
        %921 = vmatpush1.bf16.msra.mxu0 0
        %922 = vmatprep.subr.bf16.mxu0 0
        %923 = vmatpush1.bf16.msra.mxu0 0
        %924 = vmatprep.mubr.bf16.mxu0 0
        %925 = vmatmul.mubr.bf16.gmra.mrb[0].mxu0 %v881
        %v926 = vpop.f32.mrb[0].mxu0
        %v927 = vadd.f32 %v823, %v926
        %v928 = vpop.f32.mrb[0].mxu0
        %v929 = vpop.f32.mrb[0].mxu0
        %v930 = vadd.f32 %v828, %v929
        %v931 = vpop.f32.mrb[0].mxu0
        %932 = vmatprep.mubr.bf16.mxu0 0
        %933 = vmatmul.mubr.bf16.gmra.mrb[0].mxu0 %v884
        %v934 = vpop.f32.mrb[0].mxu0
        %v935 = vadd.f32 %v833, %v934
        %v936 = vpop.f32.mrb[0].mxu0
        %v937 = vpop.f32.mrb[0].mxu0
        %v938 = vadd.f32 %v838, %v937
        %v939 = vpop.f32.mrb[0].mxu0
        %940 = vmatprep.mubr.bf16.mxu0 0
        %941 = vmatmul.mubr.bf16.gmra.mrb[0].mxu0 %v887
        %v942 = vpop.f32.mrb[0].mxu0
        %v943 = vadd.f32 %v843, %v942
        %v944 = vpop.f32.mrb[0].mxu0
        %v945 = vpop.f32.mrb[0].mxu0
        %v946 = vadd.f32 %v848, %v945
        %v947 = vpop.f32.mrb[0].mxu0
        %948 = vmatprep.mubr.bf16.mxu0 0
        %949 = vmatmul.mubr.bf16.gmra.mrb[0].mxu0 %v890
        %v950 = vpop.f32.mrb[0].mxu0
        %v951 = vadd.f32 %v853, %v950
        %v952 = vpop.f32.mrb[0].mxu0
        %v953 = vpop.f32.mrb[0].mxu0
        %v954 = vadd.f32 %v858, %v953
        %v955 = vpop.f32.mrb[0].mxu0
        %956 = vdwg.mxu0
        %961 = vrot.lane.b32.xlu0 %v644, 126
        %v962 = vpop.permute.xlu0 %961
        %963 = vrot.lane.b32.xlu0 %v645, 126
        %v964 = vpop.permute.xlu0 %963
        %965 = vrot.lane.b32.xlu0 %v646, 126
        %v966 = vpop.permute.xlu0 %965
        %967 = vrot.lane.b32.xlu0 %v647, 126
        %v968 = vpop.permute.xlu0 %967
        %v973 = vadd.f32 %v927, %v962
        %v974 = vadd.f32 %v930, %v964
        %v975 = vadd.f32 %v935, %v966
        %v976 = vadd.f32 %v938, %v968
        %981 = vrot.lane.b32.xlu0 %v943, 2
        %v982 = vpop.permute.xlu0 %981
        %983 = vrot.lane.b32.xlu0 %v946, 2
        %v984 = vpop.permute.xlu0 %983
        %985 = vrot.lane.b32.xlu0 %v951, 2
        %v986 = vpop.permute.xlu0 %985
        %987 = vrot.lane.b32.xlu0 %v954, 2
        %v988 = vpop.permute.xlu0 %987
        %v993 = vadd.f32 %v648, %v982
        %v994 = vadd.f32 %v649, %v984
        %v995 = vadd.f32 %v650, %v986
        %v996 = vadd.f32 %v651, %v988
        %v997 = vpack.c.bf16 %v974, %v973
        %v998 = vpack.c.bf16 %v976, %v975
        %1001 = vrot.lane.b32.xlu0 %v997, 124
        %v1002 = vpop.permute.xlu0 %1001
        %1003 = vrot.lane.b32.xlu0 %v998, 124
        %v1004 = vpop.permute.xlu0 %1003
        %s1007 = scalar_lea.vmem %s1, 64
        %v1008 = vld [vmem:[%s1007] sm:$0xf]
        %v1009 = vld [vmem:[%s1007 + $0x4] sm:$0xf]
        %v1010 = vld [vmem:[%s1007 + $0x8] sm:$0xf]
        %v1011 = vld [vmem:[%s1007 + $0xc] sm:$0xf]
        %v1012 = vld [vmem:[%s1007 + $0x10] sm:$0xf]
        %v1013 = vld [vmem:[%s1007 + $0x14] sm:$0xf]
        %v1014 = vld [vmem:[%s1007 + $0x18] sm:$0xf]
        %v1015 = vld [vmem:[%s1007 + $0x1c] sm:$0xf]
        %v1024 = vunpack.c.l.b16 %v1008
        %v1025 = vunpack.c.l.b16 %v1009
        %v1026 = vunpack.c.l.b16 %v1010
        %v1027 = vunpack.c.l.b16 %v1011
        %v1028 = vunpack.c.l.b16 %v1012
        %v1029 = vunpack.c.l.b16 %v1013
        %v1030 = vunpack.c.l.b16 %v1014
        %v1031 = vunpack.c.l.b16 %v1015
        %v1032 = vpack.c.b16 %v1025, %v1024
        %v1033 = vpack.c.b16 %v1027, %v1026
        %v1034 = vpack.c.b16 %v1029, %v1028
        %v1035 = vpack.c.b16 %v1031, %v1030
        %v1037 = vsel %vm362, %v1032, 0
        %v1040 = vsel %vm362, %v1033, 0
        %v1043 = vsel %vm362, %v1034, 0
        %v1046 = vsel %vm362, %v1035, 0
        %1048 = vmatprep.subr.bf16.mxu0 0
        %1049 = vmatpush1.bf16.msra.mxu0 %v997
        %1050 = vmatprep.subr.bf16.mxu0 0
        %1051 = vmatpush1.bf16.msra.mxu0 %v998
        %1052 = vmatprep.subr.bf16.mxu0 0
        %1053 = vmatpush1.bf16.msra.mxu0 %v1002
        %1054 = vmatprep.subr.bf16.mxu0 0
        %1055 = vmatpush1.bf16.msra.mxu0 %v1004
        %1056 = vmatprep.subr.bf16.mxu0 0
        %1057 = vmatpush1.bf16.msra.mxu0 0
        %1058 = vmatprep.subr.bf16.mxu0 0
        %1059 = vmatpush1.bf16.msra.mxu0 0
        %1060 = vmatprep.subr.bf16.mxu0 0
        %1061 = vmatpush1.bf16.msra.mxu0 0
        %1062 = vmatprep.subr.bf16.mxu0 0
        %1063 = vmatpush1.bf16.msra.mxu0 0
        %1064 = vmatprep.subr.bf16.mxu0 0
        %1065 = vmatpush1.bf16.msra.mxu0 0
        %1066 = vmatprep.subr.bf16.mxu0 0
        %1067 = vmatpush1.bf16.msra.mxu0 0
        %1068 = vmatprep.subr.bf16.mxu0 0
        %1069 = vmatpush1.bf16.msra.mxu0 0
        %1070 = vmatprep.subr.bf16.mxu0 0
        %1071 = vmatpush1.bf16.msra.mxu0 0
        %1072 = vmatprep.subr.bf16.mxu0 0
        %1073 = vmatpush1.bf16.msra.mxu0 0
        %1074 = vmatprep.subr.bf16.mxu0 0
        %1075 = vmatpush1.bf16.msra.mxu0 0
        %1076 = vmatprep.subr.bf16.mxu0 0
        %1077 = vmatpush1.bf16.msra.mxu0 0
        %1078 = vmatprep.subr.bf16.mxu0 0
        %1079 = vmatpush1.bf16.msra.mxu0 0
        %1080 = vmatprep.mubr.bf16.mxu0 0
        %1081 = vmatmul.mubr.bf16.gmra.mrb[0].mxu0 %v1037
        %v1082 = vpop.f32.mrb[0].mxu0
        %v1083 = vadd.f32 0.0, %v1082
        %v1084 = vpop.f32.mrb[0].mxu0
        %v1085 = vpop.f32.mrb[0].mxu0
        %v1086 = vadd.f32 0.0, %v1085
        %v1087 = vpop.f32.mrb[0].mxu0
        %1088 = vmatprep.mubr.bf16.mxu0 0
        %1089 = vmatmul.mubr.bf16.gmra.mrb[0].mxu0 %v1040
        %v1090 = vpop.f32.mrb[0].mxu0
        %v1091 = vadd.f32 0.0, %v1090
        %v1092 = vpop.f32.mrb[0].mxu0
        %v1093 = vpop.f32.mrb[0].mxu0
        %v1094 = vadd.f32 0.0, %v1093
        %v1095 = vpop.f32.mrb[0].mxu0
        %1096 = vmatprep.mubr.bf16.mxu0 0
        %1097 = vmatmul.mubr.bf16.gmra.mrb[0].mxu0 %v1043
        %v1098 = vpop.f32.mrb[0].mxu0
        %v1099 = vadd.f32 0.0, %v1098
        %v1100 = vpop.f32.mrb[0].mxu0
        %v1101 = vpop.f32.mrb[0].mxu0
        %v1102 = vadd.f32 0.0, %v1101
        %v1103 = vpop.f32.mrb[0].mxu0
        %1104 = vmatprep.mubr.bf16.mxu0 0
        %1105 = vmatmul.mubr.bf16.gmra.mrb[0].mxu0 %v1046
        %v1106 = vpop.f32.mrb[0].mxu0
        %v1107 = vadd.f32 0.0, %v1106
        %v1108 = vpop.f32.mrb[0].mxu0
        %v1109 = vpop.f32.mrb[0].mxu0
        %v1110 = vadd.f32 0.0, %v1109
        %v1111 = vpop.f32.mrb[0].mxu0
        %1112 = vdwg.mxu0
        %v1113 = vtanh.pop %v1083
        %v1114 = vtanh.pop %v1086
        %v1115 = vtanh.pop %v1091
        %v1116 = vtanh.pop %v1094
        %v1117 = vxor.u32 %v1099, 2147483648
        %v1118 = vxor.u32 %v1102, 2147483648
        %v1119 = vxor.u32 %v1107, 2147483648
        %v1120 = vxor.u32 %v1110, 2147483648
        %v1121 = vmul.f32 %v1117, 1.442695
        %v1122 = vpow.pop %v1121
        %v1123 = vmul.f32 %v1118, 1.442695
        %v1124 = vpow.pop %v1123
        %v1125 = vmul.f32 %v1119, 1.442695
        %v1126 = vpow.pop %v1125
        %v1127 = vmul.f32 %v1120, 1.442695
        %v1128 = vpow.pop %v1127
        %v1129 = vadd.f32 %v1122, 1.0
        %v1130 = vadd.f32 %v1124, 1.0
        %v1131 = vadd.f32 %v1126, 1.0
        %v1132 = vadd.f32 %v1128, 1.0
        %v1133 = vrcp.pop %v1129
        %v1134 = vmul.f32 1.0, %v1133
        %v1135 = vrcp.pop %v1130
        %v1136 = vmul.f32 1.0, %v1135
        %v1137 = vrcp.pop %v1131
        %v1138 = vmul.f32 1.0, %v1137
        %v1139 = vrcp.pop %v1132
        %v1140 = vmul.f32 1.0, %v1139
        %v1141 = vmul.f32 %v1113, %v1134
        %v1142 = vmul.f32 %v1114, %v1136
        %v1143 = vmul.f32 %v1115, %v1138
        %v1144 = vmul.f32 %v1116, %v1140
        %s1145 = scalar_lea.vmem [#allocation2], 64
        %v1146 = vld [vmem:[%s1145] sm:$0xf]
        %v1147 = vld [vmem:[%s1145 + $0x4] sm:$0xf]
        %v1148 = vld [vmem:[%s1145 + $0x8] sm:$0xf]
        %v1149 = vld [vmem:[%s1145 + $0xc] sm:$0xf]
        %v1150 = vld [vmem:[%s1145 + $0x10] sm:$0xf]
        %v1151 = vld [vmem:[%s1145 + $0x14] sm:$0xf]
        %v1152 = vld [vmem:[%s1145 + $0x18] sm:$0xf]
        %v1153 = vld [vmem:[%s1145 + $0x1c] sm:$0xf]
        %v1154 = vpack.c.bf16 %v1142, %v1141
        %v1155 = vpack.c.bf16 %v1144, %v1143
        %s1156 = scalar_lea.vmem %s3, 128
        %v1157 = vld [vmem:[%s1156] sm:$0xff]
        %v1158 = vld [vmem:[%s1156 + $0x8] sm:$0xff]
        %v1159 = vld [vmem:[%s1156 + $0x10] sm:$0xff]
        %v1160 = vld [vmem:[%s1156 + $0x18] sm:$0xff]
        %v1161 = vld [vmem:[%s1156 + $0x20] sm:$0xff]
        %v1162 = vld [vmem:[%s1156 + $0x28] sm:$0xff]
        %v1163 = vld [vmem:[%s1156 + $0x30] sm:$0xff]
        %v1164 = vld [vmem:[%s1156 + $0x38] sm:$0xff]
        %1166 = vset.pattern.permute.xlu0 0
        %1167 = vperm.xlu0 %1166, %v1157
        %v1168 = vpop.permute.xlu0 %1167
        %1171 = vset.pattern.permute.xlu0 0
        %1172 = vperm.xlu0 %1171, %v1158
        %v1173 = vpop.permute.xlu0 %1172
        %1176 = vset.pattern.permute.xlu0 0
        %1177 = vperm.xlu0 %1176, %v1159
        %v1178 = vpop.permute.xlu0 %1177
        %1181 = vset.pattern.permute.xlu0 0
        %1182 = vperm.xlu0 %1181, %v1160
        %v1183 = vpop.permute.xlu0 %1182
        %1186 = vset.pattern.permute.xlu0 0
        %1187 = vperm.xlu0 %1186, %v1161
        %v1188 = vpop.permute.xlu0 %1187
        %1191 = vset.pattern.permute.xlu0 0
        %1192 = vperm.xlu0 %1191, %v1162
        %v1193 = vpop.permute.xlu0 %1192
        %1196 = vset.pattern.permute.xlu0 0
        %1197 = vperm.xlu0 %1196, %v1163
        %v1198 = vpop.permute.xlu0 %1197
        %1201 = vset.pattern.permute.xlu0 0
        %1202 = vperm.xlu0 %1201, %v1164
        %v1203 = vpop.permute.xlu0 %1202
        %v1213 = vunpack.c.l.b16 %v1146
        %v1214 = vunpack.c.l.b16 %v1147
        %v1215 = vunpack.c.l.b16 %v1148
        %v1216 = vunpack.c.l.b16 %v1149
        %v1217 = vunpack.c.l.b16 %v1150
        %v1218 = vunpack.c.l.b16 %v1151
        %v1219 = vunpack.c.l.b16 %v1152
        %v1220 = vunpack.c.l.b16 %v1153
        %v1221 = vpack.c.b16 %v1214, %v1213
        %v1222 = vpack.c.b16 %v1216, %v1215
        %v1223 = vpack.c.b16 %v1218, %v1217
        %v1224 = vpack.c.b16 %v1220, %v1219
        %v1226 = vsel %vm550, %v1221, 0
        %v1229 = vsel %vm550, %v1222, 0
        %v1232 = vsel %vm550, %v1223, 0
        %v1235 = vsel %vm550, %v1224, 0
        %1237 = vmatprep.subr.bf16.mxu0 0
        %1238 = vmatpush1.bf16.msra.mxu0 %v1154
        %1239 = vmatprep.subr.bf16.mxu0 0
        %1240 = vmatpush1.bf16.msra.mxu0 %v1155
        %1241 = vmatprep.subr.bf16.mxu0 0
        %1242 = vmatpush1.bf16.msra.mxu0 0
        %1243 = vmatprep.subr.bf16.mxu0 0
        %1244 = vmatpush1.bf16.msra.mxu0 0
        %1245 = vmatprep.subr.bf16.mxu0 0
        %1246 = vmatpush1.bf16.msra.mxu0 0
        %1247 = vmatprep.subr.bf16.mxu0 0
        %1248 = vmatpush1.bf16.msra.mxu0 0
        %1249 = vmatprep.subr.bf16.mxu0 0
        %1250 = vmatpush1.bf16.msra.mxu0 0
        %1251 = vmatprep.subr.bf16.mxu0 0
        %1252 = vmatpush1.bf16.msra.mxu0 0
        %1253 = vmatprep.subr.bf16.mxu0 0
        %1254 = vmatpush1.bf16.msra.mxu0 0
        %1255 = vmatprep.subr.bf16.mxu0 0
        %1256 = vmatpush1.bf16.msra.mxu0 0
        %1257 = vmatprep.subr.bf16.mxu0 0
        %1258 = vmatpush1.bf16.msra.mxu0 0
        %1259 = vmatprep.subr.bf16.mxu0 0
        %1260 = vmatpush1.bf16.msra.mxu0 0
        %1261 = vmatprep.subr.bf16.mxu0 0
        %1262 = vmatpush1.bf16.msra.mxu0 0
        %1263 = vmatprep.subr.bf16.mxu0 0
        %1264 = vmatpush1.bf16.msra.mxu0 0
        %1265 = vmatprep.subr.bf16.mxu0 0
        %1266 = vmatpush1.bf16.msra.mxu0 0
        %1267 = vmatprep.subr.bf16.mxu0 0
        %1268 = vmatpush1.bf16.msra.mxu0 0
        %1269 = vmatprep.mubr.bf16.mxu0 0
        %1270 = vmatmul.mubr.bf16.gmra.mrb[0].mxu0 %v1226
        %v1271 = vpop.f32.mrb[0].mxu0
        %v1272 = vadd.f32 %v1168, %v1271
        %v1273 = vpop.f32.mrb[0].mxu0
        %v1274 = vpop.f32.mrb[0].mxu0
        %v1275 = vadd.f32 %v1173, %v1274
        %v1276 = vpop.f32.mrb[0].mxu0
        %1277 = vmatprep.mubr.bf16.mxu0 0
        %1278 = vmatmul.mubr.bf16.gmra.mrb[0].mxu0 %v1229
        %v1279 = vpop.f32.mrb[0].mxu0
        %v1280 = vadd.f32 %v1178, %v1279
        %v1281 = vpop.f32.mrb[0].mxu0
        %v1282 = vpop.f32.mrb[0].mxu0
        %v1283 = vadd.f32 %v1183, %v1282
        %v1284 = vpop.f32.mrb[0].mxu0
        %1285 = vmatprep.mubr.bf16.mxu0 0
        %1286 = vmatmul.mubr.bf16.gmra.mrb[0].mxu0 %v1232
        %v1287 = vpop.f32.mrb[0].mxu0
        %v1288 = vadd.f32 %v1188, %v1287
        %v1289 = vpop.f32.mrb[0].mxu0
        %v1290 = vpop.f32.mrb[0].mxu0
        %v1291 = vadd.f32 %v1193, %v1290
        %v1292 = vpop.f32.mrb[0].mxu0
        %1293 = vmatprep.mubr.bf16.mxu0 0
        %1294 = vmatmul.mubr.bf16.gmra.mrb[0].mxu0 %v1235
        %v1295 = vpop.f32.mrb[0].mxu0
        %v1296 = vadd.f32 %v1198, %v1295
        %v1297 = vpop.f32.mrb[0].mxu0
        %v1298 = vpop.f32.mrb[0].mxu0
        %v1299 = vadd.f32 %v1203, %v1298
        %v1300 = vpop.f32.mrb[0].mxu0
        %1301 = vdwg.mxu0
        %1306 = vrot.lane.b32.xlu0 %v973, 124
        %v1307 = vpop.permute.xlu0 %1306
        %1308 = vrot.lane.b32.xlu0 %v974, 124
        %v1309 = vpop.permute.xlu0 %1308
        %1310 = vrot.lane.b32.xlu0 %v975, 124
        %v1311 = vpop.permute.xlu0 %1310
        %1312 = vrot.lane.b32.xlu0 %v976, 124
        %v1313 = vpop.permute.xlu0 %1312
        %v1318 = vadd.f32 %v1272, %v1307
        %v1319 = vadd.f32 %v1275, %v1309
        %v1320 = vadd.f32 %v1280, %v1311
        %v1321 = vadd.f32 %v1283, %v1313
        %1326 = vrot.lane.b32.xlu0 %v1288, 6
        %v1327 = vpop.permute.xlu0 %1326
        %1328 = vrot.lane.b32.xlu0 %v1291, 6
        %v1329 = vpop.permute.xlu0 %1328
        %1330 = vrot.lane.b32.xlu0 %v1296, 6
        %v1331 = vpop.permute.xlu0 %1330
        %1332 = vrot.lane.b32.xlu0 %v1299, 6
        %v1333 = vpop.permute.xlu0 %1332
        %v1338 = vadd.f32 %v993, %v1327
        %v1339 = vadd.f32 %v994, %v1329
        %v1340 = vadd.f32 %v995, %v1331
        %v1341 = vadd.f32 %v996, %v1333
        %v1342 = vpack.c.bf16 %v1319, %v1318
        %v1343 = vpack.c.bf16 %v1321, %v1320
        %1346 = vrot.lane.b32.xlu0 %v1342, 127
        %v1347 = vpop.permute.xlu0 %1346
        %1348 = vrot.lane.b32.xlu0 %v1343, 127
        %v1349 = vpop.permute.xlu0 %1348
        %s1352 = scalar_lea.vmem %s1, 96
        %v1353 = vld [vmem:[%s1352] sm:$0xf]
        %v1354 = vld [vmem:[%s1352 + $0x4] sm:$0xf]
        %v1355 = vld [vmem:[%s1352 + $0x8] sm:$0xf]
        %v1356 = vld [vmem:[%s1352 + $0xc] sm:$0xf]
        %v1357 = vld [vmem:[%s1352 + $0x10] sm:$0xf]
        %v1358 = vld [vmem:[%s1352 + $0x14] sm:$0xf]
        %v1359 = vld [vmem:[%s1352 + $0x18] sm:$0xf]
        %v1360 = vld [vmem:[%s1352 + $0x1c] sm:$0xf]
        %v1369 = vunpack.c.l.b16 %v1353
        %v1370 = vunpack.c.l.b16 %v1354
        %v1371 = vunpack.c.l.b16 %v1355
        %v1372 = vunpack.c.l.b16 %v1356
        %v1373 = vunpack.c.l.b16 %v1357
        %v1374 = vunpack.c.l.b16 %v1358
        %v1375 = vunpack.c.l.b16 %v1359
        %v1376 = vunpack.c.l.b16 %v1360
        %v1377 = vpack.c.b16 %v1370, %v1369
        %v1378 = vpack.c.b16 %v1372, %v1371
        %v1379 = vpack.c.b16 %v1374, %v1373
        %v1380 = vpack.c.b16 %v1376, %v1375
        %v1382 = vsel %vm362, %v1377, 0
        %v1385 = vsel %vm362, %v1378, 0
        %v1388 = vsel %vm362, %v1379, 0
        %v1391 = vsel %vm362, %v1380, 0
        %1393 = vmatprep.subr.bf16.mxu0 0
        %1394 = vmatpush1.bf16.msra.mxu0 %v1342
        %1395 = vmatprep.subr.bf16.mxu0 0
        %1396 = vmatpush1.bf16.msra.mxu0 %v1343
        %1397 = vmatprep.subr.bf16.mxu0 0
        %1398 = vmatpush1.bf16.msra.mxu0 %v1347
        %1399 = vmatprep.subr.bf16.mxu0 0
        %1400 = vmatpush1.bf16.msra.mxu0 %v1349
        %1401 = vmatprep.subr.bf16.mxu0 0
        %1402 = vmatpush1.bf16.msra.mxu0 0
        %1403 = vmatprep.subr.bf16.mxu0 0
        %1404 = vmatpush1.bf16.msra.mxu0 0
        %1405 = vmatprep.subr.bf16.mxu0 0
        %1406 = vmatpush1.bf16.msra.mxu0 0
        %1407 = vmatprep.subr.bf16.mxu0 0
        %1408 = vmatpush1.bf16.msra.mxu0 0
        %1409 = vmatprep.subr.bf16.mxu0 0
        %1410 = vmatpush1.bf16.msra.mxu0 0
        %1411 = vmatprep.subr.bf16.mxu0 0
        %1412 = vmatpush1.bf16.msra.mxu0 0
        %1413 = vmatprep.subr.bf16.mxu0 0
        %1414 = vmatpush1.bf16.msra.mxu0 0
        %1415 = vmatprep.subr.bf16.mxu0 0
        %1416 = vmatpush1.bf16.msra.mxu0 0
        %1417 = vmatprep.subr.bf16.mxu0 0
        %1418 = vmatpush1.bf16.msra.mxu0 0
        %1419 = vmatprep.subr.bf16.mxu0 0
        %1420 = vmatpush1.bf16.msra.mxu0 0
        %1421 = vmatprep.subr.bf16.mxu0 0
        %1422 = vmatpush1.bf16.msra.mxu0 0
        %1423 = vmatprep.subr.bf16.mxu0 0
        %1424 = vmatpush1.bf16.msra.mxu0 0
        %1425 = vmatprep.mubr.bf16.mxu0 0
        %1426 = vmatmul.mubr.bf16.gmra.mrb[0].mxu0 %v1382
        %v1427 = vpop.f32.mrb[0].mxu0
        %v1428 = vadd.f32 0.0, %v1427
        %v1429 = vpop.f32.mrb[0].mxu0
        %v1430 = vpop.f32.mrb[0].mxu0
        %v1431 = vadd.f32 0.0, %v1430
        %v1432 = vpop.f32.mrb[0].mxu0
        %1433 = vmatprep.mubr.bf16.mxu0 0
        %1434 = vmatmul.mubr.bf16.gmra.mrb[0].mxu0 %v1385
        %v1435 = vpop.f32.mrb[0].mxu0
        %v1436 = vadd.f32 0.0, %v1435
        %v1437 = vpop.f32.mrb[0].mxu0
        %v1438 = vpop.f32.mrb[0].mxu0
        %v1439 = vadd.f32 0.0, %v1438
        %v1440 = vpop.f32.mrb[0].mxu0
        %1441 = vmatprep.mubr.bf16.mxu0 0
        %1442 = vmatmul.mubr.bf16.gmra.mrb[0].mxu0 %v1388
        %v1443 = vpop.f32.mrb[0].mxu0
        %v1444 = vadd.f32 0.0, %v1443
        %v1445 = vpop.f32.mrb[0].mxu0
        %v1446 = vpop.f32.mrb[0].mxu0
        %v1447 = vadd.f32 0.0, %v1446
        %v1448 = vpop.f32.mrb[0].mxu0
        %1449 = vmatprep.mubr.bf16.mxu0 0
        %1450 = vmatmul.mubr.bf16.gmra.mrb[0].mxu0 %v1391
        %v1451 = vpop.f32.mrb[0].mxu0
        %v1452 = vadd.f32 0.0, %v1451
        %v1453 = vpop.f32.mrb[0].mxu0
        %v1454 = vpop.f32.mrb[0].mxu0
        %v1455 = vadd.f32 0.0, %v1454
        %v1456 = vpop.f32.mrb[0].mxu0
        %1457 = vdwg.mxu0
        %v1458 = vtanh.pop %v1428
        %v1459 = vtanh.pop %v1431
        %v1460 = vtanh.pop %v1436
        %v1461 = vtanh.pop %v1439
        %v1462 = vxor.u32 %v1444, 2147483648
        %v1463 = vxor.u32 %v1447, 2147483648
        %v1464 = vxor.u32 %v1452, 2147483648
        %v1465 = vxor.u32 %v1455, 2147483648
        %v1466 = vmul.f32 %v1462, 1.442695
        %v1467 = vpow.pop %v1466
        %v1468 = vmul.f32 %v1463, 1.442695
        %v1469 = vpow.pop %v1468
        %v1470 = vmul.f32 %v1464, 1.442695
        %v1471 = vpow.pop %v1470
        %v1472 = vmul.f32 %v1465, 1.442695
        %v1473 = vpow.pop %v1472
        %v1474 = vadd.f32 %v1467, 1.0
        %v1475 = vadd.f32 %v1469, 1.0
        %v1476 = vadd.f32 %v1471, 1.0
        %v1477 = vadd.f32 %v1473, 1.0
        %v1478 = vrcp.pop %v1474
        %v1479 = vmul.f32 1.0, %v1478
        %v1480 = vrcp.pop %v1475
        %v1481 = vmul.f32 1.0, %v1480
        %v1482 = vrcp.pop %v1476
        %v1483 = vmul.f32 1.0, %v1482
        %v1484 = vrcp.pop %v1477
        %v1485 = vmul.f32 1.0, %v1484
        %v1486 = vmul.f32 %v1458, %v1479
        %v1487 = vmul.f32 %v1459, %v1481
        %v1488 = vmul.f32 %v1460, %v1483
        %v1489 = vmul.f32 %v1461, %v1485
        %s1490 = scalar_lea.vmem [#allocation2], 96
        %v1491 = vld [vmem:[%s1490] sm:$0xf]
        %v1492 = vld [vmem:[%s1490 + $0x4] sm:$0xf]
        %v1493 = vld [vmem:[%s1490 + $0x8] sm:$0xf]
        %v1494 = vld [vmem:[%s1490 + $0xc] sm:$0xf]
        %v1495 = vld [vmem:[%s1490 + $0x10] sm:$0xf]
        %v1496 = vld [vmem:[%s1490 + $0x14] sm:$0xf]
        %v1497 = vld [vmem:[%s1490 + $0x18] sm:$0xf]
        %v1498 = vld [vmem:[%s1490 + $0x1c] sm:$0xf]
        %v1499 = vpack.c.bf16 %v1487, %v1486
        %v1500 = vpack.c.bf16 %v1489, %v1488
        %s1501 = scalar_lea.vmem %s3, 192
        %v1502 = vld [vmem:[%s1501] sm:$0xff]
        %v1503 = vld [vmem:[%s1501 + $0x8] sm:$0xff]
        %v1504 = vld [vmem:[%s1501 + $0x10] sm:$0xff]
        %v1505 = vld [vmem:[%s1501 + $0x18] sm:$0xff]
        %v1506 = vld [vmem:[%s1501 + $0x20] sm:$0xff]
        %v1507 = vld [vmem:[%s1501 + $0x28] sm:$0xff]
        %v1508 = vld [vmem:[%s1501 + $0x30] sm:$0xff]
        %v1509 = vld [vmem:[%s1501 + $0x38] sm:$0xff]
        %1511 = vset.pattern.permute.xlu0 0
        %1512 = vperm.xlu0 %1511, %v1502
        %v1513 = vpop.permute.xlu0 %1512
        %1516 = vset.pattern.permute.xlu0 0
        %1517 = vperm.xlu0 %1516, %v1503
        %v1518 = vpop.permute.xlu0 %1517
        %1521 = vset.pattern.permute.xlu0 0
        %1522 = vperm.xlu0 %1521, %v1504
        %v1523 = vpop.permute.xlu0 %1522
        %1526 = vset.pattern.permute.xlu0 0
        %1527 = vperm.xlu0 %1526, %v1505
        %v1528 = vpop.permute.xlu0 %1527
        %1531 = vset.pattern.permute.xlu0 0
        %1532 = vperm.xlu0 %1531, %v1506
        %v1533 = vpop.permute.xlu0 %1532
        %1536 = vset.pattern.permute.xlu0 0
        %1537 = vperm.xlu0 %1536, %v1507
        %v1538 = vpop.permute.xlu0 %1537
        %1541 = vset.pattern.permute.xlu0 0
        %1542 = vperm.xlu0 %1541, %v1508
        %v1543 = vpop.permute.xlu0 %1542
        %1546 = vset.pattern.permute.xlu0 0
        %1547 = vperm.xlu0 %1546, %v1509
        %v1548 = vpop.permute.xlu0 %1547
        %v1558 = vunpack.c.l.b16 %v1491
        %v1559 = vunpack.c.l.b16 %v1492
        %v1560 = vunpack.c.l.b16 %v1493
        %v1561 = vunpack.c.l.b16 %v1494
        %v1562 = vunpack.c.l.b16 %v1495
        %v1563 = vunpack.c.l.b16 %v1496
        %v1564 = vunpack.c.l.b16 %v1497
        %v1565 = vunpack.c.l.b16 %v1498
        %v1566 = vpack.c.b16 %v1559, %v1558
        %v1567 = vpack.c.b16 %v1561, %v1560
        %v1568 = vpack.c.b16 %v1563, %v1562
        %v1569 = vpack.c.b16 %v1565, %v1564
        %v1571 = vsel %vm550, %v1566, 0
        %v1574 = vsel %vm550, %v1567, 0
        %v1577 = vsel %vm550, %v1568, 0
        %v1580 = vsel %vm550, %v1569, 0
        %1582 = vmatprep.subr.bf16.mxu0 0
        %1583 = vmatpush1.bf16.msra.mxu0 %v1499
        %1584 = vmatprep.subr.bf16.mxu0 0
        %1585 = vmatpush1.bf16.msra.mxu0 %v1500
        %1586 = vmatprep.subr.bf16.mxu0 0
        %1587 = vmatpush1.bf16.msra.mxu0 0
        %1588 = vmatprep.subr.bf16.mxu0 0
        %1589 = vmatpush1.bf16.msra.mxu0 0
        %1590 = vmatprep.subr.bf16.mxu0 0
        %1591 = vmatpush1.bf16.msra.mxu0 0
        %1592 = vmatprep.subr.bf16.mxu0 0
        %1593 = vmatpush1.bf16.msra.mxu0 0
        %1594 = vmatprep.subr.bf16.mxu0 0
        %1595 = vmatpush1.bf16.msra.mxu0 0
        %1596 = vmatprep.subr.bf16.mxu0 0
        %1597 = vmatpush1.bf16.msra.mxu0 0
        %1598 = vmatprep.subr.bf16.mxu0 0
        %1599 = vmatpush1.bf16.msra.mxu0 0
        %1600 = vmatprep.subr.bf16.mxu0 0
        %1601 = vmatpush1.bf16.msra.mxu0 0
        %1602 = vmatprep.subr.bf16.mxu0 0
        %1603 = vmatpush1.bf16.msra.mxu0 0
        %1604 = vmatprep.subr.bf16.mxu0 0
        %1605 = vmatpush1.bf16.msra.mxu0 0
        %1606 = vmatprep.subr.bf16.mxu0 0
        %1607 = vmatpush1.bf16.msra.mxu0 0
        %1608 = vmatprep.subr.bf16.mxu0 0
        %1609 = vmatpush1.bf16.msra.mxu0 0
        %1610 = vmatprep.subr.bf16.mxu0 0
        %1611 = vmatpush1.bf16.msra.mxu0 0
        %1612 = vmatprep.subr.bf16.mxu0 0
        %1613 = vmatpush1.bf16.msra.mxu0 0
        %1614 = vmatprep.mubr.bf16.mxu0 0
        %1615 = vmatmul.mubr.bf16.gmra.mrb[0].mxu0 %v1571
        %v1616 = vpop.f32.mrb[0].mxu0
        %v1617 = vadd.f32 %v1513, %v1616
        %v1618 = vpop.f32.mrb[0].mxu0
        %v1619 = vpop.f32.mrb[0].mxu0
        %v1620 = vadd.f32 %v1518, %v1619
        %v1621 = vpop.f32.mrb[0].mxu0
        %1622 = vmatprep.mubr.bf16.mxu0 0
        %1623 = vmatmul.mubr.bf16.gmra.mrb[0].mxu0 %v1574
        %v1624 = vpop.f32.mrb[0].mxu0
        %v1625 = vadd.f32 %v1523, %v1624
        %v1626 = vpop.f32.mrb[0].mxu0
        %v1627 = vpop.f32.mrb[0].mxu0
        %v1628 = vadd.f32 %v1528, %v1627
        %v1629 = vpop.f32.mrb[0].mxu0
        %1630 = vmatprep.mubr.bf16.mxu0 0
        %1631 = vmatmul.mubr.bf16.gmra.mrb[0].mxu0 %v1577
        %v1632 = vpop.f32.mrb[0].mxu0
        %v1633 = vadd.f32 %v1533, %v1632
        %v1634 = vpop.f32.mrb[0].mxu0
        %v1635 = vpop.f32.mrb[0].mxu0
        %v1636 = vadd.f32 %v1538, %v1635
        %v1637 = vpop.f32.mrb[0].mxu0
        %1638 = vmatprep.mubr.bf16.mxu0 0
        %1639 = vmatmul.mubr.bf16.gmra.mrb[0].mxu0 %v1580
        %v1640 = vpop.f32.mrb[0].mxu0
        %v1641 = vadd.f32 %v1543, %v1640
        %v1642 = vpop.f32.mrb[0].mxu0
        %v1643 = vpop.f32.mrb[0].mxu0
        %v1644 = vadd.f32 %v1548, %v1643
        %v1645 = vpop.f32.mrb[0].mxu0
        %1646 = vdwg.mxu0
        %1651 = vrot.lane.b32.xlu0 %v1318, 127
        %v1652 = vpop.permute.xlu0 %1651
        %1653 = vrot.lane.b32.xlu0 %v1319, 127
        %v1654 = vpop.permute.xlu0 %1653
        %1655 = vrot.lane.b32.xlu0 %v1320, 127
        %v1656 = vpop.permute.xlu0 %1655
        %1657 = vrot.lane.b32.xlu0 %v1321, 127
        %v1658 = vpop.permute.xlu0 %1657
        %v1663 = vadd.f32 %v1617, %v1652
        %v1664 = vadd.f32 %v1620, %v1654
        %v1665 = vadd.f32 %v1625, %v1656
        %v1666 = vadd.f32 %v1628, %v1658
        %1671 = vrot.lane.b32.xlu0 %v1633, 7
        %v1672 = vpop.permute.xlu0 %1671
        %1673 = vrot.lane.b32.xlu0 %v1636, 7
        %v1674 = vpop.permute.xlu0 %1673
        %1675 = vrot.lane.b32.xlu0 %v1641, 7
        %v1676 = vpop.permute.xlu0 %1675
        %1677 = vrot.lane.b32.xlu0 %v1644, 7
        %v1678 = vpop.permute.xlu0 %1677
        %v1683 = vadd.f32 %v1338, %v1672
        %v1684 = vadd.f32 %v1339, %v1674
        %v1685 = vadd.f32 %v1340, %v1676
        %v1686 = vadd.f32 %v1341, %v1678
        %v1687 = vpack.c.bf16 %v1664, %v1663
        %v1688 = vpack.c.bf16 %v1666, %v1665
        %1691 = vrot.lane.b32.xlu0 %v1687, 126
        %v1692 = vpop.permute.xlu0 %1691
        %1693 = vrot.lane.b32.xlu0 %v1688, 126
        %v1694 = vpop.permute.xlu0 %1693
        %s1697 = scalar_lea.vmem %s1, 128
        %v1698 = vld [vmem:[%s1697] sm:$0xf]
        %v1699 = vld [vmem:[%s1697 + $0x4] sm:$0xf]
        %v1700 = vld [vmem:[%s1697 + $0x8] sm:$0xf]
        %v1701 = vld [vmem:[%s1697 + $0xc] sm:$0xf]
        %v1702 = vld [vmem:[%s1697 + $0x10] sm:$0xf]
        %v1703 = vld [vmem:[%s1697 + $0x14] sm:$0xf]
        %v1704 = vld [vmem:[%s1697 + $0x18] sm:$0xf]
        %v1705 = vld [vmem:[%s1697 + $0x1c] sm:$0xf]
        %v1714 = vunpack.c.l.b16 %v1698
        %v1715 = vunpack.c.l.b16 %v1699
        %v1716 = vunpack.c.l.b16 %v1700
        %v1717 = vunpack.c.l.b16 %v1701
        %v1718 = vunpack.c.l.b16 %v1702
        %v1719 = vunpack.c.l.b16 %v1703
        %v1720 = vunpack.c.l.b16 %v1704
        %v1721 = vunpack.c.l.b16 %v1705
        %v1722 = vpack.c.b16 %v1715, %v1714
        %v1723 = vpack.c.b16 %v1717, %v1716
        %v1724 = vpack.c.b16 %v1719, %v1718
        %v1725 = vpack.c.b16 %v1721, %v1720
        %v1727 = vsel %vm362, %v1722, 0
        %v1730 = vsel %vm362, %v1723, 0
        %v1733 = vsel %vm362, %v1724, 0
        %v1736 = vsel %vm362, %v1725, 0
        %1738 = vmatprep.subr.bf16.mxu0 0
        %1739 = vmatpush1.bf16.msra.mxu0 %v1687
        %1740 = vmatprep.subr.bf16.mxu0 0
        %1741 = vmatpush1.bf16.msra.mxu0 %v1688
        %1742 = vmatprep.subr.bf16.mxu0 0
        %1743 = vmatpush1.bf16.msra.mxu0 %v1692
        %1744 = vmatprep.subr.bf16.mxu0 0
        %1745 = vmatpush1.bf16.msra.mxu0 %v1694
        %1746 = vmatprep.subr.bf16.mxu0 0
        %1747 = vmatpush1.bf16.msra.mxu0 0
        %1748 = vmatprep.subr.bf16.mxu0 0
        %1749 = vmatpush1.bf16.msra.mxu0 0
        %1750 = vmatprep.subr.bf16.mxu0 0
        %1751 = vmatpush1.bf16.msra.mxu0 0
        %1752 = vmatprep.subr.bf16.mxu0 0
        %1753 = vmatpush1.bf16.msra.mxu0 0
        %1754 = vmatprep.subr.bf16.mxu0 0
        %1755 = vmatpush1.bf16.msra.mxu0 0
        %1756 = vmatprep.subr.bf16.mxu0 0
        %1757 = vmatpush1.bf16.msra.mxu0 0
        %1758 = vmatprep.subr.bf16.mxu0 0
        %1759 = vmatpush1.bf16.msra.mxu0 0
        %1760 = vmatprep.subr.bf16.mxu0 0
        %1761 = vmatpush1.bf16.msra.mxu0 0
        %1762 = vmatprep.subr.bf16.mxu0 0
        %1763 = vmatpush1.bf16.msra.mxu0 0
        %1764 = vmatprep.subr.bf16.mxu0 0
        %1765 = vmatpush1.bf16.msra.mxu0 0
        %1766 = vmatprep.subr.bf16.mxu0 0
        %1767 = vmatpush1.bf16.msra.mxu0 0
        %1768 = vmatprep.subr.bf16.mxu0 0
        %1769 = vmatpush1.bf16.msra.mxu0 0
        %1770 = vmatprep.mubr.bf16.mxu0 0
        %1771 = vmatmul.mubr.bf16.gmra.mrb[0].mxu0 %v1727
        %v1772 = vpop.f32.mrb[0].mxu0
        %v1773 = vadd.f32 0.0, %v1772
        %v1774 = vpop.f32.mrb[0].mxu0
        %v1775 = vpop.f32.mrb[0].mxu0
        %v1776 = vadd.f32 0.0, %v1775
        %v1777 = vpop.f32.mrb[0].mxu0
        %1778 = vmatprep.mubr.bf16.mxu0 0
        %1779 = vmatmul.mubr.bf16.gmra.mrb[0].mxu0 %v1730
        %v1780 = vpop.f32.mrb[0].mxu0
        %v1781 = vadd.f32 0.0, %v1780
        %v1782 = vpop.f32.mrb[0].mxu0
        %v1783 = vpop.f32.mrb[0].mxu0
        %v1784 = vadd.f32 0.0, %v1783
        %v1785 = vpop.f32.mrb[0].mxu0
        %1786 = vmatprep.mubr.bf16.mxu0 0
        %1787 = vmatmul.mubr.bf16.gmra.mrb[0].mxu0 %v1733
        %v1788 = vpop.f32.mrb[0].mxu0
        %v1789 = vadd.f32 0.0, %v1788
        %v1790 = vpop.f32.mrb[0].mxu0
        %v1791 = vpop.f32.mrb[0].mxu0
        %v1792 = vadd.f32 0.0, %v1791
        %v1793 = vpop.f32.mrb[0].mxu0
        %1794 = vmatprep.mubr.bf16.mxu0 0
        %1795 = vmatmul.mubr.bf16.gmra.mrb[0].mxu0 %v1736
        %v1796 = vpop.f32.mrb[0].mxu0
        %v1797 = vadd.f32 0.0, %v1796
        %v1798 = vpop.f32.mrb[0].mxu0
        %v1799 = vpop.f32.mrb[0].mxu0
        %v1800 = vadd.f32 0.0, %v1799
        %v1801 = vpop.f32.mrb[0].mxu0
        %1802 = vdwg.mxu0
        %v1803 = vtanh.pop %v1773
        %v1804 = vtanh.pop %v1776
        %v1805 = vtanh.pop %v1781
        %v1806 = vtanh.pop %v1784
        %v1807 = vxor.u32 %v1789, 2147483648
        %v1808 = vxor.u32 %v1792, 2147483648
        %v1809 = vxor.u32 %v1797, 2147483648
        %v1810 = vxor.u32 %v1800, 2147483648
        %v1811 = vmul.f32 %v1807, 1.442695
        %v1812 = vpow.pop %v1811
        %v1813 = vmul.f32 %v1808, 1.442695
        %v1814 = vpow.pop %v1813
        %v1815 = vmul.f32 %v1809, 1.442695
        %v1816 = vpow.pop %v1815
        %v1817 = vmul.f32 %v1810, 1.442695
        %v1818 = vpow.pop %v1817
        %v1819 = vadd.f32 %v1812, 1.0
        %v1820 = vadd.f32 %v1814, 1.0
        %v1821 = vadd.f32 %v1816, 1.0
        %v1822 = vadd.f32 %v1818, 1.0
        %v1823 = vrcp.pop %v1819
        %v1824 = vmul.f32 1.0, %v1823
        %v1825 = vrcp.pop %v1820
        %v1826 = vmul.f32 1.0, %v1825
        %v1827 = vrcp.pop %v1821
        %v1828 = vmul.f32 1.0, %v1827
        %v1829 = vrcp.pop %v1822
        %v1830 = vmul.f32 1.0, %v1829
        %v1831 = vmul.f32 %v1803, %v1824
        %v1832 = vmul.f32 %v1804, %v1826
        %v1833 = vmul.f32 %v1805, %v1828
        %v1834 = vmul.f32 %v1806, %v1830
        %s1835 = scalar_lea.vmem [#allocation2], 128
        %v1836 = vld [vmem:[%s1835] sm:$0xf]
        %v1837 = vld [vmem:[%s1835 + $0x4] sm:$0xf]
        %v1838 = vld [vmem:[%s1835 + $0x8] sm:$0xf]
        %v1839 = vld [vmem:[%s1835 + $0xc] sm:$0xf]
        %v1840 = vld [vmem:[%s1835 + $0x10] sm:$0xf]
        %v1841 = vld [vmem:[%s1835 + $0x14] sm:$0xf]
        %v1842 = vld [vmem:[%s1835 + $0x18] sm:$0xf]
        %v1843 = vld [vmem:[%s1835 + $0x1c] sm:$0xf]
        %v1844 = vpack.c.bf16 %v1832, %v1831
        %v1845 = vpack.c.bf16 %v1834, %v1833
        %s1846 = scalar_lea.vmem %s3, 256
        %v1847 = vld [vmem:[%s1846] sm:$0xff]
        %v1848 = vld [vmem:[%s1846 + $0x8] sm:$0xff]
        %v1849 = vld [vmem:[%s1846 + $0x10] sm:$0xff]
        %v1850 = vld [vmem:[%s1846 + $0x18] sm:$0xff]
        %v1851 = vld [vmem:[%s1846 + $0x20] sm:$0xff]
        %v1852 = vld [vmem:[%s1846 + $0x28] sm:$0xff]
        %v1853 = vld [vmem:[%s1846 + $0x30] sm:$0xff]
        %v1854 = vld [vmem:[%s1846 + $0x38] sm:$0xff]
        %1856 = vset.pattern.permute.xlu0 0
        %1857 = vperm.xlu0 %1856, %v1847
        %v1858 = vpop.permute.xlu0 %1857
        %1861 = vset.pattern.permute.xlu0 0
        %1862 = vperm.xlu0 %1861, %v1848
        %v1863 = vpop.permute.xlu0 %1862
        %1866 = vset.pattern.permute.xlu0 0
        %1867 = vperm.xlu0 %1866, %v1849
        %v1868 = vpop.permute.xlu0 %1867
        %1871 = vset.pattern.permute.xlu0 0
        %1872 = vperm.xlu0 %1871, %v1850
        %v1873 = vpop.permute.xlu0 %1872
        %1876 = vset.pattern.permute.xlu0 0
        %1877 = vperm.xlu0 %1876, %v1851
        %v1878 = vpop.permute.xlu0 %1877
        %1881 = vset.pattern.permute.xlu0 0
        %1882 = vperm.xlu0 %1881, %v1852
        %v1883 = vpop.permute.xlu0 %1882
        %1886 = vset.pattern.permute.xlu0 0
        %1887 = vperm.xlu0 %1886, %v1853
        %v1888 = vpop.permute.xlu0 %1887
        %1891 = vset.pattern.permute.xlu0 0
        %1892 = vperm.xlu0 %1891, %v1854
        %v1893 = vpop.permute.xlu0 %1892
        %v1903 = vunpack.c.l.b16 %v1836
        %v1904 = vunpack.c.l.b16 %v1837
        %v1905 = vunpack.c.l.b16 %v1838
        %v1906 = vunpack.c.l.b16 %v1839
        %v1907 = vunpack.c.l.b16 %v1840
        %v1908 = vunpack.c.l.b16 %v1841
        %v1909 = vunpack.c.l.b16 %v1842
        %v1910 = vunpack.c.l.b16 %v1843
        %v1911 = vpack.c.b16 %v1904, %v1903
        %v1912 = vpack.c.b16 %v1906, %v1905
        %v1913 = vpack.c.b16 %v1908, %v1907
        %v1914 = vpack.c.b16 %v1910, %v1909
        %v1916 = vsel %vm550, %v1911, 0
        %v1919 = vsel %vm550, %v1912, 0
        %v1922 = vsel %vm550, %v1913, 0
        %v1925 = vsel %vm550, %v1914, 0
        %1927 = vmatprep.subr.bf16.mxu0 0
        %1928 = vmatpush1.bf16.msra.mxu0 %v1844
        %1929 = vmatprep.subr.bf16.mxu0 0
        %1930 = vmatpush1.bf16.msra.mxu0 %v1845
        %1931 = vmatprep.subr.bf16.mxu0 0
        %1932 = vmatpush1.bf16.msra.mxu0 0
        %1933 = vmatprep.subr.bf16.mxu0 0
        %1934 = vmatpush1.bf16.msra.mxu0 0
        %1935 = vmatprep.subr.bf16.mxu0 0
        %1936 = vmatpush1.bf16.msra.mxu0 0
        %1937 = vmatprep.subr.bf16.mxu0 0
        %1938 = vmatpush1.bf16.msra.mxu0 0
        %1939 = vmatprep.subr.bf16.mxu0 0
        %1940 = vmatpush1.bf16.msra.mxu0 0
        %1941 = vmatprep.subr.bf16.mxu0 0
        %1942 = vmatpush1.bf16.msra.mxu0 0
        %1943 = vmatprep.subr.bf16.mxu0 0
        %1944 = vmatpush1.bf16.msra.mxu0 0
        %1945 = vmatprep.subr.bf16.mxu0 0
        %1946 = vmatpush1.bf16.msra.mxu0 0
        %1947 = vmatprep.subr.bf16.mxu0 0
        %1948 = vmatpush1.bf16.msra.mxu0 0
        %1949 = vmatprep.subr.bf16.mxu0 0
        %1950 = vmatpush1.bf16.msra.mxu0 0
        %1951 = vmatprep.subr.bf16.mxu0 0
        %1952 = vmatpush1.bf16.msra.mxu0 0
        %1953 = vmatprep.subr.bf16.mxu0 0
        %1954 = vmatpush1.bf16.msra.mxu0 0
        %1955 = vmatprep.subr.bf16.mxu0 0
        %1956 = vmatpush1.bf16.msra.mxu0 0
        %1957 = vmatprep.subr.bf16.mxu0 0
        %1958 = vmatpush1.bf16.msra.mxu0 0
        %1959 = vmatprep.mubr.bf16.mxu0 0
        %1960 = vmatmul.mubr.bf16.gmra.mrb[0].mxu0 %v1916
        %v1961 = vpop.f32.mrb[0].mxu0
        %v1962 = vadd.f32 %v1858, %v1961
        %v1963 = vpop.f32.mrb[0].mxu0
        %v1964 = vpop.f32.mrb[0].mxu0
        %v1965 = vadd.f32 %v1863, %v1964
        %v1966 = vpop.f32.mrb[0].mxu0
        %1967 = vmatprep.mubr.bf16.mxu0 0
        %1968 = vmatmul.mubr.bf16.gmra.mrb[0].mxu0 %v1919
        %v1969 = vpop.f32.mrb[0].mxu0
        %v1970 = vadd.f32 %v1868, %v1969
        %v1971 = vpop.f32.mrb[0].mxu0
        %v1972 = vpop.f32.mrb[0].mxu0
        %v1973 = vadd.f32 %v1873, %v1972
        %v1974 = vpop.f32.mrb[0].mxu0
        %1975 = vmatprep.mubr.bf16.mxu0 0
        %1976 = vmatmul.mubr.bf16.gmra.mrb[0].mxu0 %v1922
        %v1977 = vpop.f32.mrb[0].mxu0
        %v1978 = vadd.f32 %v1878, %v1977
        %v1979 = vpop.f32.mrb[0].mxu0
        %v1980 = vpop.f32.mrb[0].mxu0
        %v1981 = vadd.f32 %v1883, %v1980
        %v1982 = vpop.f32.mrb[0].mxu0
        %1983 = vmatprep.mubr.bf16.mxu0 0
        %1984 = vmatmul.mubr.bf16.gmra.mrb[0].mxu0 %v1925
        %v1985 = vpop.f32.mrb[0].mxu0
        %v1986 = vadd.f32 %v1888, %v1985
        %v1987 = vpop.f32.mrb[0].mxu0
        %v1988 = vpop.f32.mrb[0].mxu0
        %v1989 = vadd.f32 %v1893, %v1988
        %v1990 = vpop.f32.mrb[0].mxu0
        %1991 = vdwg.mxu0
        %1996 = vrot.lane.b32.xlu0 %v1663, 126
        %v1997 = vpop.permute.xlu0 %1996
        %1998 = vrot.lane.b32.xlu0 %v1664, 126
        %v1999 = vpop.permute.xlu0 %1998
        %2000 = vrot.lane.b32.xlu0 %v1665, 126
        %v2001 = vpop.permute.xlu0 %2000
        %2002 = vrot.lane.b32.xlu0 %v1666, 126
        %v2003 = vpop.permute.xlu0 %2002
        %v2008 = vadd.f32 %v1962, %v1997
        %v2009 = vadd.f32 %v1965, %v1999
        %v2010 = vadd.f32 %v1970, %v2001
        %v2011 = vadd.f32 %v1973, %v2003
        %2016 = vrot.lane.b32.xlu0 %v1978, 9
        %v2017 = vpop.permute.xlu0 %2016
        %2018 = vrot.lane.b32.xlu0 %v1981, 9
        %v2019 = vpop.permute.xlu0 %2018
        %2020 = vrot.lane.b32.xlu0 %v1986, 9
        %v2021 = vpop.permute.xlu0 %2020
        %2022 = vrot.lane.b32.xlu0 %v1989, 9
        %v2023 = vpop.permute.xlu0 %2022
        %v2028 = vadd.f32 %v1683, %v2017
        %v2029 = vadd.f32 %v1684, %v2019
        %v2030 = vadd.f32 %v1685, %v2021
        %v2031 = vadd.f32 %v1686, %v2023
        %v2032 = vpack.c.bf16 %v2009, %v2008
        %v2033 = vpack.c.bf16 %v2011, %v2010
        %2036 = vrot.lane.b32.xlu0 %v2032, 124
        %v2037 = vpop.permute.xlu0 %2036
        %2038 = vrot.lane.b32.xlu0 %v2033, 124
        %v2039 = vpop.permute.xlu0 %2038
        %s2042 = scalar_lea.vmem %s1, 160
        %v2043 = vld [vmem:[%s2042] sm:$0xf]
        %v2044 = vld [vmem:[%s2042 + $0x4] sm:$0xf]
        %v2045 = vld [vmem:[%s2042 + $0x8] sm:$0xf]
        %v2046 = vld [vmem:[%s2042 + $0xc] sm:$0xf]
        %v2047 = vld [vmem:[%s2042 + $0x10] sm:$0xf]
        %v2048 = vld [vmem:[%s2042 + $0x14] sm:$0xf]
        %v2049 = vld [vmem:[%s2042 + $0x18] sm:$0xf]
        %v2050 = vld [vmem:[%s2042 + $0x1c] sm:$0xf]
        %v2059 = vunpack.c.l.b16 %v2043
        %v2060 = vunpack.c.l.b16 %v2044
        %v2061 = vunpack.c.l.b16 %v2045
        %v2062 = vunpack.c.l.b16 %v2046
        %v2063 = vunpack.c.l.b16 %v2047
        %v2064 = vunpack.c.l.b16 %v2048
        %v2065 = vunpack.c.l.b16 %v2049
        %v2066 = vunpack.c.l.b16 %v2050
        %v2067 = vpack.c.b16 %v2060, %v2059
        %v2068 = vpack.c.b16 %v2062, %v2061
        %v2069 = vpack.c.b16 %v2064, %v2063
        %v2070 = vpack.c.b16 %v2066, %v2065
        %v2072 = vsel %vm362, %v2067, 0
        %v2075 = vsel %vm362, %v2068, 0
        %v2078 = vsel %vm362, %v2069, 0
        %v2081 = vsel %vm362, %v2070, 0
        %2083 = vmatprep.subr.bf16.mxu0 0
        %2084 = vmatpush1.bf16.msra.mxu0 %v2032
        %2085 = vmatprep.subr.bf16.mxu0 0
        %2086 = vmatpush1.bf16.msra.mxu0 %v2033
        %2087 = vmatprep.subr.bf16.mxu0 0
        %2088 = vmatpush1.bf16.msra.mxu0 %v2037
        %2089 = vmatprep.subr.bf16.mxu0 0
        %2090 = vmatpush1.bf16.msra.mxu0 %v2039
        %2091 = vmatprep.subr.bf16.mxu0 0
        %2092 = vmatpush1.bf16.msra.mxu0 0
        %2093 = vmatprep.subr.bf16.mxu0 0
        %2094 = vmatpush1.bf16.msra.mxu0 0
        %2095 = vmatprep.subr.bf16.mxu0 0
        %2096 = vmatpush1.bf16.msra.mxu0 0
        %2097 = vmatprep.subr.bf16.mxu0 0
        %2098 = vmatpush1.bf16.msra.mxu0 0
        %2099 = vmatprep.subr.bf16.mxu0 0
        %2100 = vmatpush1.bf16.msra.mxu0 0
        %2101 = vmatprep.subr.bf16.mxu0 0
        %2102 = vmatpush1.bf16.msra.mxu0 0
        %2103 = vmatprep.subr.bf16.mxu0 0
        %2104 = vmatpush1.bf16.msra.mxu0 0
        %2105 = vmatprep.subr.bf16.mxu0 0
        %2106 = vmatpush1.bf16.msra.mxu0 0
        %2107 = vmatprep.subr.bf16.mxu0 0
        %2108 = vmatpush1.bf16.msra.mxu0 0
        %2109 = vmatprep.subr.bf16.mxu0 0
        %2110 = vmatpush1.bf16.msra.mxu0 0
        %2111 = vmatprep.subr.bf16.mxu0 0
        %2112 = vmatpush1.bf16.msra.mxu0 0
        %2113 = vmatprep.subr.bf16.mxu0 0
        %2114 = vmatpush1.bf16.msra.mxu0 0
        %2115 = vmatprep.mubr.bf16.mxu0 0
        %2116 = vmatmul.mubr.bf16.gmra.mrb[0].mxu0 %v2072
        %v2117 = vpop.f32.mrb[0].mxu0
        %v2118 = vadd.f32 0.0, %v2117
        %v2119 = vpop.f32.mrb[0].mxu0
        %v2120 = vpop.f32.mrb[0].mxu0
        %v2121 = vadd.f32 0.0, %v2120
        %v2122 = vpop.f32.mrb[0].mxu0
        %2123 = vmatprep.mubr.bf16.mxu0 0
        %2124 = vmatmul.mubr.bf16.gmra.mrb[0].mxu0 %v2075
        %v2125 = vpop.f32.mrb[0].mxu0
        %v2126 = vadd.f32 0.0, %v2125
        %v2127 = vpop.f32.mrb[0].mxu0
        %v2128 = vpop.f32.mrb[0].mxu0
        %v2129 = vadd.f32 0.0, %v2128
        %v2130 = vpop.f32.mrb[0].mxu0
        %2131 = vmatprep.mubr.bf16.mxu0 0
        %2132 = vmatmul.mubr.bf16.gmra.mrb[0].mxu0 %v2078
        %v2133 = vpop.f32.mrb[0].mxu0
        %v2134 = vadd.f32 0.0, %v2133
        %v2135 = vpop.f32.mrb[0].mxu0
        %v2136 = vpop.f32.mrb[0].mxu0
        %v2137 = vadd.f32 0.0, %v2136
        %v2138 = vpop.f32.mrb[0].mxu0
        %2139 = vmatprep.mubr.bf16.mxu0 0
        %2140 = vmatmul.mubr.bf16.gmra.mrb[0].mxu0 %v2081
        %v2141 = vpop.f32.mrb[0].mxu0
        %v2142 = vadd.f32 0.0, %v2141
        %v2143 = vpop.f32.mrb[0].mxu0
        %v2144 = vpop.f32.mrb[0].mxu0
        %v2145 = vadd.f32 0.0, %v2144
        %v2146 = vpop.f32.mrb[0].mxu0
        %2147 = vdwg.mxu0
        %v2148 = vtanh.pop %v2118
        %v2149 = vtanh.pop %v2121
        %v2150 = vtanh.pop %v2126
        %v2151 = vtanh.pop %v2129
        %v2152 = vxor.u32 %v2134, 2147483648
        %v2153 = vxor.u32 %v2137, 2147483648
        %v2154 = vxor.u32 %v2142, 2147483648
        %v2155 = vxor.u32 %v2145, 2147483648
        %v2156 = vmul.f32 %v2152, 1.442695
        %v2157 = vpow.pop %v2156
        %v2158 = vmul.f32 %v2153, 1.442695
        %v2159 = vpow.pop %v2158
        %v2160 = vmul.f32 %v2154, 1.442695
        %v2161 = vpow.pop %v2160
        %v2162 = vmul.f32 %v2155, 1.442695
        %v2163 = vpow.pop %v2162
        %v2164 = vadd.f32 %v2157, 1.0
        %v2165 = vadd.f32 %v2159, 1.0
        %v2166 = vadd.f32 %v2161, 1.0
        %v2167 = vadd.f32 %v2163, 1.0
        %v2168 = vrcp.pop %v2164
        %v2169 = vmul.f32 1.0, %v2168
        %v2170 = vrcp.pop %v2165
        %v2171 = vmul.f32 1.0, %v2170
        %v2172 = vrcp.pop %v2166
        %v2173 = vmul.f32 1.0, %v2172
        %v2174 = vrcp.pop %v2167
        %v2175 = vmul.f32 1.0, %v2174
        %v2176 = vmul.f32 %v2148, %v2169
        %v2177 = vmul.f32 %v2149, %v2171
        %v2178 = vmul.f32 %v2150, %v2173
        %v2179 = vmul.f32 %v2151, %v2175
        %s2180 = scalar_lea.vmem [#allocation2], 160
        %v2181 = vld [vmem:[%s2180] sm:$0xf]
        %v2182 = vld [vmem:[%s2180 + $0x4] sm:$0xf]
        %v2183 = vld [vmem:[%s2180 + $0x8] sm:$0xf]
        %v2184 = vld [vmem:[%s2180 + $0xc] sm:$0xf]
        %v2185 = vld [vmem:[%s2180 + $0x10] sm:$0xf]
        %v2186 = vld [vmem:[%s2180 + $0x14] sm:$0xf]
        %v2187 = vld [vmem:[%s2180 + $0x18] sm:$0xf]
        %v2188 = vld [vmem:[%s2180 + $0x1c] sm:$0xf]
        %v2189 = vpack.c.bf16 %v2177, %v2176
        %v2190 = vpack.c.bf16 %v2179, %v2178
        %s2191 = scalar_lea.vmem %s3, 320
        %v2192 = vld [vmem:[%s2191] sm:$0xff]
        %v2193 = vld [vmem:[%s2191 + $0x8] sm:$0xff]
        %v2194 = vld [vmem:[%s2191 + $0x10] sm:$0xff]
        %v2195 = vld [vmem:[%s2191 + $0x18] sm:$0xff]
        %v2196 = vld [vmem:[%s2191 + $0x20] sm:$0xff]
        %v2197 = vld [vmem:[%s2191 + $0x28] sm:$0xff]
        %v2198 = vld [vmem:[%s2191 + $0x30] sm:$0xff]
        %v2199 = vld [vmem:[%s2191 + $0x38] sm:$0xff]
        %2201 = vset.pattern.permute.xlu0 0
        %2202 = vperm.xlu0 %2201, %v2192
        %v2203 = vpop.permute.xlu0 %2202
        %2205 = vset.pattern.permute.xlu0 0
        %2206 = vperm.xlu0 %2205, %v2193
        %v2207 = vpop.permute.xlu0 %2206
        %2209 = vset.pattern.permute.xlu0 0
        %2210 = vperm.xlu0 %2209, %v2194
        %v2211 = vpop.permute.xlu0 %2210
        %2213 = vset.pattern.permute.xlu0 0
        %2214 = vperm.xlu0 %2213, %v2195
        %v2215 = vpop.permute.xlu0 %2214
        %2217 = vset.pattern.permute.xlu0 0
        %2218 = vperm.xlu0 %2217, %v2196
        %v2219 = vpop.permute.xlu0 %2218
        %2222 = vset.pattern.permute.xlu0 0
        %2223 = vperm.xlu0 %2222, %v2197
        %v2224 = vpop.permute.xlu0 %2223
        %2227 = vset.pattern.permute.xlu0 0
        %2228 = vperm.xlu0 %2227, %v2198
        %v2229 = vpop.permute.xlu0 %2228
        %2232 = vset.pattern.permute.xlu0 0
        %2233 = vperm.xlu0 %2232, %v2199
        %v2234 = vpop.permute.xlu0 %2233
        %v2244 = vunpack.c.l.b16 %v2181
        %v2245 = vunpack.c.l.b16 %v2182
        %v2246 = vunpack.c.l.b16 %v2183
        %v2247 = vunpack.c.l.b16 %v2184
        %v2248 = vunpack.c.l.b16 %v2185
        %v2249 = vunpack.c.l.b16 %v2186
        %v2250 = vunpack.c.l.b16 %v2187
        %v2251 = vunpack.c.l.b16 %v2188
        %v2252 = vpack.c.b16 %v2245, %v2244
        %v2253 = vpack.c.b16 %v2247, %v2246
        %v2254 = vpack.c.b16 %v2249, %v2248
        %v2255 = vpack.c.b16 %v2251, %v2250
        %v2257 = vsel %vm550, %v2252, 0
        %v2260 = vsel %vm550, %v2253, 0
        %v2263 = vsel %vm550, %v2254, 0
        %v2266 = vsel %vm550, %v2255, 0
        %2268 = vmatprep.subr.bf16.mxu0 0
        %2269 = vmatpush1.bf16.msra.mxu0 %v2189
        %2270 = vmatprep.subr.bf16.mxu0 0
        %2271 = vmatpush1.bf16.msra.mxu0 %v2190
        %2272 = vmatprep.subr.bf16.mxu0 0
        %2273 = vmatpush1.bf16.msra.mxu0 0
        %2274 = vmatprep.subr.bf16.mxu0 0
        %2275 = vmatpush1.bf16.msra.mxu0 0
        %2276 = vmatprep.subr.bf16.mxu0 0
        %2277 = vmatpush1.bf16.msra.mxu0 0
        %2278 = vmatprep.subr.bf16.mxu0 0
        %2279 = vmatpush1.bf16.msra.mxu0 0
        %2280 = vmatprep.subr.bf16.mxu0 0
        %2281 = vmatpush1.bf16.msra.mxu0 0
        %2282 = vmatprep.subr.bf16.mxu0 0
        %2283 = vmatpush1.bf16.msra.mxu0 0
        %2284 = vmatprep.subr.bf16.mxu0 0
        %2285 = vmatpush1.bf16.msra.mxu0 0
        %2286 = vmatprep.subr.bf16.mxu0 0
        %2287 = vmatpush1.bf16.msra.mxu0 0
        %2288 = vmatprep.subr.bf16.mxu0 0
        %2289 = vmatpush1.bf16.msra.mxu0 0
        %2290 = vmatprep.subr.bf16.mxu0 0
        %2291 = vmatpush1.bf16.msra.mxu0 0
        %2292 = vmatprep.subr.bf16.mxu0 0
        %2293 = vmatpush1.bf16.msra.mxu0 0
        %2294 = vmatprep.subr.bf16.mxu0 0
        %2295 = vmatpush1.bf16.msra.mxu0 0
        %2296 = vmatprep.subr.bf16.mxu0 0
        %2297 = vmatpush1.bf16.msra.mxu0 0
        %2298 = vmatprep.subr.bf16.mxu0 0
        %2299 = vmatpush1.bf16.msra.mxu0 0
        %2300 = vmatprep.mubr.bf16.mxu0 0
        %2301 = vmatmul.mubr.bf16.gmra.mrb[0].mxu0 %v2257
        %v2302 = vpop.f32.mrb[0].mxu0
        %v2303 = vpop.f32.mrb[0].mxu0
        %v2304 = vpop.f32.mrb[0].mxu0
        %v2305 = vpop.f32.mrb[0].mxu0
        %2306 = vmatprep.mubr.bf16.mxu0 0
        %2307 = vmatmul.mubr.bf16.gmra.mrb[0].mxu0 %v2260
        %v2308 = vpop.f32.mrb[0].mxu0
        %v2309 = vpop.f32.mrb[0].mxu0
        %v2310 = vpop.f32.mrb[0].mxu0
        %v2311 = vpop.f32.mrb[0].mxu0
        %2312 = vmatprep.mubr.bf16.mxu0 0
        %2313 = vmatmul.mubr.bf16.gmra.mrb[0].mxu0 %v2263
        %v2314 = vpop.f32.mrb[0].mxu0
        %v2315 = vadd.f32 %v2219, %v2314
        %v2316 = vpop.f32.mrb[0].mxu0
        %v2317 = vpop.f32.mrb[0].mxu0
        %v2318 = vadd.f32 %v2224, %v2317
        %v2319 = vpop.f32.mrb[0].mxu0
        %2320 = vmatprep.mubr.bf16.mxu0 0
        %2321 = vmatmul.mubr.bf16.gmra.mrb[0].mxu0 %v2266
        %v2322 = vpop.f32.mrb[0].mxu0
        %v2323 = vadd.f32 %v2229, %v2322
        %v2324 = vpop.f32.mrb[0].mxu0
        %v2325 = vpop.f32.mrb[0].mxu0
        %v2326 = vadd.f32 %v2234, %v2325
        %v2327 = vpop.f32.mrb[0].mxu0
        %2328 = vdwg.mxu0
        %2333 = vrot.lane.b32.xlu0 %v2315, 13
        %v2334 = vpop.permute.xlu0 %2333
        %2335 = vrot.lane.b32.xlu0 %v2318, 13
        %v2336 = vpop.permute.xlu0 %2335
        %2337 = vrot.lane.b32.xlu0 %v2323, 13
        %v2338 = vpop.permute.xlu0 %2337
        %2339 = vrot.lane.b32.xlu0 %v2326, 13
        %v2340 = vpop.permute.xlu0 %2339
        %v2345 = vadd.f32 %v2028, %v2334
        %v2346 = vadd.f32 %v2029, %v2336
        %v2347 = vadd.f32 %v2030, %v2338
        %v2348 = vadd.f32 %v2031, %v2340
        %v2349 = vmax.f32 %v2345, 0.0
        %v2350 = vmax.f32 %v2346, 0.0
        %v2351 = vmax.f32 %v2347, 0.0
        %v2352 = vmax.f32 %v2348, 0.0
        %v2353 = vld [vmem:[%s4] sm:$0xf]
        %v2354 = vld [vmem:[%s4 + $0x4] sm:$0xf]
        %v2355 = vld [vmem:[%s4 + $0x8] sm:$0xf]
        %v2356 = vld [vmem:[%s4 + $0xc] sm:$0xf]
        %v2357 = vpack.c.bf16 %v2350, %v2349
        %v2358 = vpack.c.bf16 %v2352, %v2351
        %v2359 = vld [vmem:[%s5] sm:$0xff]
        %v2360 = vld [vmem:[%s5 + $0x8] sm:$0xff]
        %v2361 = vld [vmem:[%s5 + $0x10] sm:$0xff]
        %v2362 = vld [vmem:[%s5 + $0x18] sm:$0xff]
        %2364 = vset.pattern.permute.xlu0 0
        %2365 = vperm.xlu0 %2364, %v2359
        %v2366 = vpop.permute.xlu0 %2365
        %2369 = vset.pattern.permute.xlu0 0
        %2370 = vperm.xlu0 %2369, %v2360
        %v2371 = vpop.permute.xlu0 %2370
        %2374 = vset.pattern.permute.xlu0 0
        %2375 = vperm.xlu0 %2374, %v2361
        %v2376 = vpop.permute.xlu0 %2375
        %2379 = vset.pattern.permute.xlu0 0
        %2380 = vperm.xlu0 %2379, %v2362
        %v2381 = vpop.permute.xlu0 %2380
        %v2387 = vunpack.c.l.b16 %v2353
        %v2388 = vunpack.c.l.b16 %v2354
        %v2389 = vunpack.c.l.b16 %v2355
        %v2390 = vunpack.c.l.b16 %v2356
        %v2391 = vpack.c.b16 %v2388, %v2387
        %v2392 = vpack.c.b16 %v2390, %v2389
        %2395 = vrot.lane.b32.xlu0 %v2357, 115
        %v2396 = vpop.permute.xlu0 %2395
        %2397 = vrot.lane.b32.xlu0 %v2358, 115
        %v2398 = vpop.permute.xlu0 %2397
        %v2402 = vsel %vm550, %v2391, 0
        %v2405 = vsel %vm550, %v2392, 0
        %2407 = vmatprep.subr.bf16.mxu0 0
        %2408 = vmatpush1.bf16.msra.mxu0 %v2396
        %2409 = vmatprep.subr.bf16.mxu0 0
        %2410 = vmatpush1.bf16.msra.mxu0 %v2398
        %2411 = vmatprep.subr.bf16.mxu0 0
        %2412 = vmatpush1.bf16.msra.mxu0 0
        %2413 = vmatprep.subr.bf16.mxu0 0
        %2414 = vmatpush1.bf16.msra.mxu0 0
        %2415 = vmatprep.subr.bf16.mxu0 0
        %2416 = vmatpush1.bf16.msra.mxu0 0
        %2417 = vmatprep.subr.bf16.mxu0 0
        %2418 = vmatpush1.bf16.msra.mxu0 0
        %2419 = vmatprep.subr.bf16.mxu0 0
        %2420 = vmatpush1.bf16.msra.mxu0 0
        %2421 = vmatprep.subr.bf16.mxu0 0
        %2422 = vmatpush1.bf16.msra.mxu0 0
        %2423 = vmatprep.subr.bf16.mxu0 0
        %2424 = vmatpush1.bf16.msra.mxu0 0
        %2425 = vmatprep.subr.bf16.mxu0 0
        %2426 = vmatpush1.bf16.msra.mxu0 0
        %2427 = vmatprep.subr.bf16.mxu0 0
        %2428 = vmatpush1.bf16.msra.mxu0 0
        %2429 = vmatprep.subr.bf16.mxu0 0
        %2430 = vmatpush1.bf16.msra.mxu0 0
        %2431 = vmatprep.subr.bf16.mxu0 0
        %2432 = vmatpush1.bf16.msra.mxu0 0
        %2433 = vmatprep.subr.bf16.mxu0 0
        %2434 = vmatpush1.bf16.msra.mxu0 0
        %2435 = vmatprep.subr.bf16.mxu0 0
        %2436 = vmatpush1.bf16.msra.mxu0 0
        %2437 = vmatprep.subr.bf16.mxu0 0
        %2438 = vmatpush1.bf16.msra.mxu0 0
        %2439 = vmatprep.mubr.bf16.mxu0 0
        %2440 = vmatmul.mubr.bf16.gmra.mrb[0].mxu0 %v2402
        %v2441 = vpop.f32.mrb[0].mxu0
        %v2442 = vadd.f32 %v2366, %v2441
        %v2443 = vpop.f32.mrb[0].mxu0
        %v2444 = vpop.f32.mrb[0].mxu0
        %v2445 = vadd.f32 %v2371, %v2444
        %v2446 = vpop.f32.mrb[0].mxu0
        %2447 = vmatprep.mubr.bf16.mxu0 0
        %2448 = vmatmul.mubr.bf16.gmra.mrb[0].mxu0 %v2405
        %v2449 = vpop.f32.mrb[0].mxu0
        %v2450 = vadd.f32 %v2376, %v2449
        %v2451 = vpop.f32.mrb[0].mxu0
        %v2452 = vpop.f32.mrb[0].mxu0
        %v2453 = vadd.f32 %v2381, %v2452
        %v2454 = vpop.f32.mrb[0].mxu0
        %2455 = vdwg.mxu0
        %v2456 = vmax.f32 %v2442, 0.0
        %v2457 = vmax.f32 %v2445, 0.0
        %v2458 = vmax.f32 %v2450, 0.0
        %v2459 = vmax.f32 %v2453, 0.0
        %v2460 = vld [vmem:[%s6] sm:$0xf]
        %v2461 = vld [vmem:[%s6 + $0x4] sm:$0xf]
        %v2462 = vpack.c.bf16 %v2457, %v2456
        %v2463 = vpack.c.bf16 %v2459, %v2458
        %v2464 = vld [vmem:[%s7] sm:$0xff]
        %v2465 = vld [vmem:[%s7 + $0x8] sm:$0xff]
        %2467 = vset.pattern.permute.xlu0 0
        %2468 = vperm.xlu0 %2467, %v2464
        %v2469 = vpop.permute.xlu0 %2468
        %2472 = vset.pattern.permute.xlu0 0
        %2473 = vperm.xlu0 %2472, %v2465
        %v2474 = vpop.permute.xlu0 %2473
        %v2478 = vunpack.c.l.b16 %v2460
        %v2479 = vunpack.c.l.b16 %v2461
        %v2480 = vpack.c.b16 %v2479, %v2478
        %v2482 = vsel %vm550, %v2480, 0
        %2484 = vmatprep.subr.bf16.mxu0 0
        %2485 = vmatpush1.bf16.msra.mxu0 %v2462
        %2486 = vmatprep.subr.bf16.mxu0 0
        %2487 = vmatpush1.bf16.msra.mxu0 %v2463
        %2488 = vmatprep.subr.bf16.mxu0 0
        %2489 = vmatpush1.bf16.msra.mxu0 0
        %2490 = vmatprep.subr.bf16.mxu0 0
        %2491 = vmatpush1.bf16.msra.mxu0 0
        %2492 = vmatprep.subr.bf16.mxu0 0
        %2493 = vmatpush1.bf16.msra.mxu0 0
        %2494 = vmatprep.subr.bf16.mxu0 0
        %2495 = vmatpush1.bf16.msra.mxu0 0
        %2496 = vmatprep.subr.bf16.mxu0 0
        %2497 = vmatpush1.bf16.msra.mxu0 0
        %2498 = vmatprep.subr.bf16.mxu0 0
        %2499 = vmatpush1.bf16.msra.mxu0 0
        %2500 = vmatprep.subr.bf16.mxu0 0
        %2501 = vmatpush1.bf16.msra.mxu0 0
        %2502 = vmatprep.subr.bf16.mxu0 0
        %2503 = vmatpush1.bf16.msra.mxu0 0
        %2504 = vmatprep.subr.bf16.mxu0 0
        %2505 = vmatpush1.bf16.msra.mxu0 0
        %2506 = vmatprep.subr.bf16.mxu0 0
        %2507 = vmatpush1.bf16.msra.mxu0 0
        %2508 = vmatprep.subr.bf16.mxu0 0
        %2509 = vmatpush1.bf16.msra.mxu0 0
        %2510 = vmatprep.subr.bf16.mxu0 0
        %2511 = vmatpush1.bf16.msra.mxu0 0
        %2512 = vmatprep.subr.bf16.mxu0 0
        %2513 = vmatpush1.bf16.msra.mxu0 0
        %2514 = vmatprep.subr.bf16.mxu0 0
        %2515 = vmatpush1.bf16.msra.mxu0 0
        %2516 = vmatprep.mubr.bf16.mxu0 0
        %2517 = vmatmul.mubr.bf16.gmra.mrb[0].mxu0 %v2482
        %v2518 = vpop.f32.mrb[0].mxu0
        %v2519 = vadd.f32 %v2469, %v2518
        %v2520 = vpop.f32.mrb[0].mxu0
        %v2521 = vpop.f32.mrb[0].mxu0
        %v2522 = vadd.f32 %v2474, %v2521
        %v2523 = vpop.f32.mrb[0].mxu0
        %2524 = vdwg.mxu0
        %vm2525 = vcmask 146432
        %2526 = vst.msk [vmem:[%s313] sm:$0xff] %vm2525, %v2519
        %2527 = vst.msk [vmem:[%s313 + $0x8] sm:$0xff] %vm2525, %v2522
        %s2528 = sand.u32 %s204, 1
        %s2529 = scalar_lea.sflag [#allocation4], %s2528
        %s2530 = sand.u32 %s204, 1
        %s2531 = smul.addr %s2530, 16
        %s2532 = scalar_lea.vmem [#allocation5], %s2531
        // Predicated region
        $region57: #{_lambda_.1} parent=51 // pred_check
          %p2533 = pneg %p214
        $region58: #{_lambda_.1} parent=51 // pred_check_branch
          %2535 = sbr.rel (%p2533) target = $region60
        $region59: #{_lambda_.1} parent=51 // pred_region
          %s2537 = ssub.s32 256, 256
          %2538 = vsyncadd %s2529, %s2537
          %s2539 = smul.addr %s23, 2
          %s2540 = smul.addr %s2539, 128
          %s2541 = scalar_lea.hbm %s8, %s2540
          %s2542 = sshll.u32 %s2532, 4
          %s2543 = int_to_ptr.vmem [resolvable:$true] %s2542
          %2548 = dma.vmem_to_hbm [thread:$0]  %s2543, 256, %s2541, %s2529, 128, 128, 8
        $region60: #{_lambda_.1} parent=51 // pred_fallthru
          _
      $region52: #{_lambda_.1} parent=5 // pred_fallthru
        _
      %p2549 = scmp.le.s32.totalorder 2, %s18
      // Predicated region
      $region61: #{_lambda_.1} parent=5 // pred_check
        %p2550 = pneg %p2549
      $region62: #{_lambda_.1} parent=5 // pred_check_branch
        %2552 = sbr.rel (%p2550) target = $region64
      $region63: #{_lambda_.1} parent=5 // pred_region
        %s2553 = ssub.s32 %s18, 2
        // Predicated region
        $region65: #{_lambda_.1} parent=63 // pred_check
          %p2554 = pneg %p220
        $region66: #{_lambda_.1} parent=63 // pred_check_branch
          %2556 = sbr.rel (%p2554) target = $region68
        $region67: #{_lambda_.1} parent=63 // pred_region
          %s2557 = sand.u32 %s205, 1
          %s2558 = scalar_lea.sflag [#allocation4], %s2557
          %s2559 = sand.u32 %s205, 1
          %s2560 = smul.addr %s2559, 16
          %s2561 = scalar_lea.vmem [#allocation5], %s2560
          %2562 = dma.done %s2558, 256
        $region68: #{_lambda_.1} parent=63 // pred_fallthru
          _
      $region64: #{_lambda_.1} parent=5 // pred_fallthru
        _
    $region6: #{_lambda_.1} parent=1 // loop_footer
      %s22 = sadd.s32 1, %s18
    $region7: #{_lambda_.1} parent=1 // loop_footer_branch
      %17 = sbr.rel target = $region3
    $region8: #{_lambda_.1} parent=1 // loop_exit
      _
    %2563 = vsyncpa [#allocation3], 1
    %s2564 = scalar_lea.sflag [#allocation3], 1
    %2565 = vsyncpa %s2564, 1
    %2566 = vsyncpa [#allocation4], 1
    %s2567 = scalar_lea.sflag [#allocation4], 1
    %2568 = vsyncpa %s2567, 1

</llo_original>
